<compile_context>
chip_gen: v7x
topology: tpu7x:2x2x1
jax: 0.10.0
libtpu: 0.0.40
codegen_flags: <defaults>
</compile_context>

<pallas_src>
import functools

import jax
import jax.numpy as jnp
from jax import lax
from jax.experimental import pallas as pl
from jax.experimental.pallas import tpu as pltpu


def _round_up(x, m):
    return (x + m - 1) // m * m


# ----------------------------------------------------------------------------
# Fused Pallas kernel: one block of `bb` samples per grid step.
# ----------------------------------------------------------------------------
def _lenet5_kernel(x_ref, m1_ref, b1_ref, ph1_ref, pw1_ref,
                   m2_ref, b2_ref, ph2_ref, pw2_ref,
                   w3_ref, b3_ref, w4_ref, b4_ref, w5_ref, b5_ref,
                   out_ref, g2_scr):
    f32 = jnp.float32
    bf16 = jnp.bfloat16
    bb = x_ref.shape[0]

    # Loop-invariant broadcast biases (hoisted out of the per-sample loop).
    b1b = jnp.broadcast_to(b1_ref[...], (28, 6 * 28))        # (28, 168) f32
    b2b = jnp.broadcast_to(b2_ref[...], (10, 16 * 10))       # (10, 160) f32

    # ---- per-sample conv front: conv1+tanh+pool1+conv2+tanh+pool2 ----------
    def sample_body(b, carry):
        xs = x_ref[b]                                        # (32, 32) f32
        # conv1 (1->6, k=5): 5 banded MXU matmuls; acc initialized with bias.
        h1 = b1b
        for di in range(5):
            h1 = h1 + jnp.dot(xs[di:di + 28, :].astype(bf16), m1_ref[di],
                              preferred_element_type=f32)    # (28, 168)
        z1 = jnp.tanh(h1)
        # avgpool 2x2: H pooling then block-diagonal W pooling (6 ch merged).
        t1 = jnp.dot(ph1_ref[...], z1.astype(bf16),
                     preferred_element_type=f32)             # (14, 168)
        g1 = jnp.dot(t1.astype(bf16), pw1_ref[...],
                     preferred_element_type=f32)             # (14, 84)
        # conv2 (6->16, k=5): 5 banded matmuls, channels merged into K=84.
        h2 = b2b
        for di in range(5):
            h2 = h2 + jnp.dot(g1[di:di + 10, :].astype(bf16), m2_ref[di],
                              preferred_element_type=f32)    # (10, 160)
        z2 = jnp.tanh(h2)
        # avgpool 2x2.
        t2 = jnp.dot(ph2_ref[...], z2.astype(bf16),
                     preferred_element_type=f32)             # (5, 160)
        g2 = jnp.dot(t2.astype(bf16), pw2_ref[...],
                     preferred_element_type=f32)             # (5, 80)
        # Stash pooled features for the batched tail.
        for u in range(5):
            g2_scr[u, pl.ds(b, 1), :] = g2[u:u + 1, :]
        return carry

    lax.fori_loop(0, bb, sample_body, 0)

    # ---- batched tail over the whole block (M = bb) -------------------------
    # conv3 (16->120, 5x5 -> 1x1) == FC over (u, c, v), accumulated per u.
    z3 = jnp.broadcast_to(b3_ref[...], (bb, 120))            # (bb, 120) f32
    for u in range(5):
        z3 = z3 + jnp.dot(g2_scr[u].astype(bf16), w3_ref[u],
                          preferred_element_type=f32)
    z3 = jnp.tanh(z3).astype(bf16)
    # fc1 + tanh, fc2 (output padded to a lane-dense 128-wide slab).
    z4 = jnp.tanh(jnp.dot(z3, w4_ref[...], preferred_element_type=f32)
                  + b4_ref[...]).astype(bf16)                # (bb, 84)
    out_ref[...] = (jnp.dot(z4, w5_ref[...], preferred_element_type=f32)
                    + b5_ref[...])                           # (bb, nc_pad)


# ----------------------------------------------------------------------------
# One-time parameter preparation (all weight transforms outside the hot path).
# ----------------------------------------------------------------------------
def _band_matrices(w, w_in, w_out):
    """w: (Cout, Cin, k, k) -> (Cin, k, W_in, Cout*W_out) banded matrices.

    M[c, i, p, o*W_out + v] = w[o, c, i, p - v] if 0 <= p - v < k else 0, so
    (input row slice) @ M accumulates the cross-correlation exactly like
    torch.nn.Conv2d (stride 1, no padding).
    """
    cout, cin, k, _ = w.shape
    j = jnp.arange(k)[:, None, None]
    p = jnp.arange(w_in)[None, :, None]
    v = jnp.arange(w_out)[None, None, :]
    sel = (p == v + j).astype(w.dtype)                       # (k, W_in, W_out)
    m = jnp.einsum('ocij,jpv->cipov', w, sel)                # (Cin,k,Win,Cout,Wout)
    return m.reshape(cin, k, w_in, cout * w_out)


def _half_pool_matrix(n_in, dtype=jnp.float32):
    """(n_in, n_in//2) with M[v, x] = 0.5 iff v // 2 == x (2x avg pooling)."""
    n_out = n_in // 2
    return 0.5 * (jnp.arange(n_in)[:, None] // 2
                  == jnp.arange(n_out)[None, :]).astype(dtype)


def prepare_pallas_params(params):
    f32, bf16 = jnp.float32, jnp.bfloat16
    w1 = params["conv1_w"].astype(f32)
    b1 = params["conv1_b"].astype(f32)
    w2 = params["conv2_w"].astype(f32)
    b2 = params["conv2_b"].astype(f32)
    w3 = params["conv3_w"].astype(f32)
    b3 = params["conv3_b"].astype(f32)
    fw1 = params["fc1_w"].astype(f32)
    fb1 = params["fc1_b"].astype(f32)
    fw2 = params["fc2_w"].astype(f32)
    fb2 = params["fc2_b"].astype(f32)
    n_classes = fw2.shape[0]
    nc_pad = _round_up(max(n_classes, 1), 128)

    # Banded conv weight matrices (conv2 channels merged along K).
    m1 = _band_matrices(w1, 32, 28)[0]                       # (5, 32, 168)
    m2 = _band_matrices(w2, 14, 10)                          # (6, 5, 14, 160)
    m2cat = m2.transpose(1, 0, 2, 3).reshape(5, 6 * 14, 16 * 10)  # (5, 84, 160)

    # Pooling matrices (H pooling on the left, W pooling on the right).
    b28 = _half_pool_matrix(28)                              # (28, 14)
    b10 = _half_pool_matrix(10)                              # (10, 5)
    ph1 = b28.T                                              # (14, 28)
    ph2 = b10.T                                              # (5, 10)
    # Block-diagonal W pooling (all 6 / 16 channels in one matmul).
    pw1 = jnp.einsum('co,vx->cvox', jnp.eye(6, dtype=f32), b28)
    pw1 = pw1.reshape(6 * 28, 6 * 14)                        # (168, 84)
    pw2 = jnp.einsum('ab,vx->avbx', jnp.eye(16, dtype=f32), b10)
    pw2 = pw2.reshape(16 * 10, 16 * 5)                       # (160, 80)

    # conv3 as an FC over (c, h, w): W3r[u, c*5+v, o] = w3[o, c, u, v].
    w3r = w3.transpose(2, 1, 3, 0).reshape(5, 16 * 5, 120)

    # fc2 padded to a lane-dense 128-wide output slab.
    w5p = jnp.zeros((84, nc_pad), f32).at[:, :n_classes].set(fw2.T)
    b5p = jnp.zeros((1, nc_pad), f32).at[0, :n_classes].set(fb2)

    return {
        "m1": m1.astype(bf16),
        "b1": jnp.repeat(b1, 28).reshape(1, 6 * 28),         # (1, 168) f32
        "ph1": ph1.astype(bf16), "pw1": pw1.astype(bf16),
        "m2": m2cat.astype(bf16),
        "b2": jnp.repeat(b2, 10).reshape(1, 16 * 10),        # (1, 160) f32
        "ph2": ph2.astype(bf16), "pw2": pw2.astype(bf16),
        "w3": w3r.astype(bf16), "b3": b3.reshape(1, 120),
        "w4": fw1.T.astype(bf16), "b4": fb1.reshape(1, 84),
        "w5": w5p.astype(bf16), "b5": b5p,
    }


# ----------------------------------------------------------------------------
# Forward pass: one pallas_call, grid over batch blocks (parallel on megacore).
# ----------------------------------------------------------------------------
def _rep_spec(a):
    if a.ndim == 2:
        return pl.BlockSpec(a.shape, lambda i: (0, 0))
    return pl.BlockSpec(a.shape, lambda i: (0, 0, 0))


@functools.partial(jax.jit, static_argnames=("n_classes", "block_b"))
def lenet5_forward(prep, x, *, n_classes, block_b=128):
    assert x.shape[1:] == (1, 32, 32), x.shape
    n = x.shape[0]
    nc_pad = prep["b5"].shape[-1]

    bb = min(block_b, _round_up(n, 8))       # samples per grid step
    n_pad = _round_up(n, bb)

    xr = x.reshape(n, 32, 32)
    if n_pad != n:
        xr = jnp.pad(xr, ((0, n_pad - n), (0, 0), (0, 0)))

    weight_names = ["m1", "b1", "ph1", "pw1", "m2", "b2", "ph2", "pw2",
                    "w3", "b3", "w4", "b4", "w5", "b5"]
    weights = [prep[k] for k in weight_names]

    out = pl.pallas_call(
        _lenet5_kernel,
        out_shape=jax.ShapeDtypeStruct((n_pad, nc_pad), jnp.float32),
        grid=(n_pad // bb,),
        in_specs=[pl.BlockSpec((bb, 32, 32), lambda i: (i, 0, 0))]
                 + [_rep_spec(w) for w in weights],
        out_specs=pl.BlockSpec((bb, nc_pad), lambda i: (i, 0)),
        scratch_shapes=[pltpu.VMEM((5, bb, 80), jnp.float32)],
        compiler_params=pltpu.CompilerParams(
            dimension_semantics=("parallel",)),
    )(xr, *weights)
    return out[:n, :n_classes]


# ----------------------------------------------------------------------------
# PyTorch-style init and a pure-JAX reference for verification.
# ----------------------------------------------------------------------------
def init_lenet5_params(key, n_classes):
    def uni(k, shape, fan_in):
        bound = 1.0 / jnp.sqrt(float(fan_in))
        return jax.random.uniform(k, shape, jnp.float32, -bound, bound)

    ks = jax.random.split(key, 10)
    return {
        "conv1_w": uni(ks[0], (6, 1, 5, 5), 1 * 5 * 5),
        "conv1_b": uni(ks[1], (6,), 1 * 5 * 5),
        "conv2_w": uni(ks[2], (16, 6, 5, 5), 6 * 5 * 5),
        "conv2_b": uni(ks[3], (16,), 6 * 5 * 5),
        "conv3_w": uni(ks[4], (120, 16, 5, 5), 16 * 5 * 5),
        "conv3_b": uni(ks[5], (120,), 16 * 5 * 5),
        "fc1_w": uni(ks[6], (84, 120), 120),
        "fc1_b": uni(ks[7], (84,), 120),
        "fc2_w": uni(ks[8], (n_classes, 84), 84),
        "fc2_b": uni(ks[9], (n_classes,), 84),
    }


def lenet5_reference(params, x):
    dn = ("NCHW", "OIHW", "NCHW")

    def conv(h, w, b):
        out = lax.conv_general_dilated(h, w, window_strides=(1, 1),
                                       padding="VALID", dimension_numbers=dn)
        return jnp.tanh(out + b[None, :, None, None])

    def pool(h):
        s = lax.reduce_window(h, 0.0, lax.add, (1, 1, 2, 2), (1, 1, 2, 2),
                              "VALID")
        return 0.25 * s

    h = pool(conv(x, params["conv1_w"], params["conv1_b"]))
    h = pool(conv(h, params["conv2_w"], params["conv2_b"]))
    h = conv(h, params["conv3_w"], params["conv3_b"])
    h = h.reshape(h.shape[0], -1)
    h = jnp.tanh(h @ params["fc1_w"].T + params["fc1_b"])
    return h @ params["fc2_w"].T + params["fc2_b"]


if __name__ == "__main__":
    n_classes = 10
    batch = 2

    key = jax.random.PRNGKey(0)
    k_param, k_x = jax.random.split(key)
    params = init_lenet5_params(k_param, n_classes)
    # LeNet5 expects 1x32x32 inputs so conv3 reduces spatial to 1x1.
    x = jax.random.normal(k_x, (batch, 1, 32, 32), dtype=jnp.float32)

    prep = prepare_pallas_params(params)
    logits = jax.block_until_ready(
        lenet5_forward(prep, x, n_classes=n_classes))
    assert logits.shape == (batch, n_classes), logits.shape
    assert logits.dtype == jnp.float32

    with jax.default_matmul_precision("float32"):
        ref = jax.block_until_ready(lenet5_reference(params, x))
    max_err = float(jnp.max(jnp.abs(logits - ref)))
    # bf16 MXU operands (f32 accumulation) -> slightly looser tolerance.
    assert jnp.allclose(logits, ref, atol=2e-2, rtol=2e-2), max_err

    print("KERNEL_OK")
</pallas_src>

<mosaic_0001>
module attributes {stable_mosaic.version = 11 : i64} {
  func.func @_lenet5_kernel(%arg0: i32, %arg1: memref<8x32x32xf32, #tpu.memory_space<vmem>>, %arg2: memref<5x32x168xbf16, #tpu.memory_space<vmem>>, %arg3: memref<1x168xf32, #tpu.memory_space<vmem>>, %arg4: memref<14x28xbf16, #tpu.memory_space<vmem>>, %arg5: memref<168x84xbf16, #tpu.memory_space<vmem>>, %arg6: memref<5x84x160xbf16, #tpu.memory_space<vmem>>, %arg7: memref<1x160xf32, #tpu.memory_space<vmem>>, %arg8: memref<5x10xbf16, #tpu.memory_space<vmem>>, %arg9: memref<160x80xbf16, #tpu.memory_space<vmem>>, %arg10: memref<5x80x120xbf16, #tpu.memory_space<vmem>>, %arg11: memref<1x120xf32, #tpu.memory_space<vmem>>, %arg12: memref<120x84xbf16, #tpu.memory_space<vmem>>, %arg13: memref<1x84xf32, #tpu.memory_space<vmem>>, %arg14: memref<84x128xbf16, #tpu.memory_space<vmem>>, %arg15: memref<1x128xf32, #tpu.memory_space<vmem>>, %arg16: memref<8x128xf32, #tpu.memory_space<vmem>>, %arg17: memref<5x8x80xf32, #tpu.memory_space<vmem>>) attributes {dimension_semantics = [#tpu.dimension_semantics<parallel>], iteration_bounds = array<i64: 1>, scalar_prefetch = 0 : i64, scratch_operands = 1 : i64, tpu.core_type = #tpu.core_type<tc>, window_params = [{transform_indices = @transform_0, window_bounds = array<i64: 8, 32, 32>}, {pipeline_mode = #tpu.pipeline_mode<synchronous>, transform_indices = @transform_1, window_bounds = array<i64: 5, 32, 168>}, {pipeline_mode = #tpu.pipeline_mode<synchronous>, transform_indices = @transform_2, window_bounds = array<i64: 1, 168>}, {pipeline_mode = #tpu.pipeline_mode<synchronous>, transform_indices = @transform_3, window_bounds = array<i64: 14, 28>}, {pipeline_mode = #tpu.pipeline_mode<synchronous>, transform_indices = @transform_4, window_bounds = array<i64: 168, 84>}, {pipeline_mode = #tpu.pipeline_mode<synchronous>, transform_indices = @transform_5, window_bounds = array<i64: 5, 84, 160>}, {pipeline_mode = #tpu.pipeline_mode<synchronous>, transform_indices = @transform_6, window_bounds = array<i64: 1, 160>}, {pipeline_mode = #tpu.pipeline_mode<synchronous>, transform_indices = @transform_7, window_bounds = array<i64: 5, 10>}, {pipeline_mode = #tpu.pipeline_mode<synchronous>, transform_indices = @transform_8, window_bounds = array<i64: 160, 80>}, {pipeline_mode = #tpu.pipeline_mode<synchronous>, transform_indices = @transform_9, window_bounds = array<i64: 5, 80, 120>}, {pipeline_mode = #tpu.pipeline_mode<synchronous>, transform_indices = @transform_10, window_bounds = array<i64: 1, 120>}, {pipeline_mode = #tpu.pipeline_mode<synchronous>, transform_indices = @transform_11, window_bounds = array<i64: 120, 84>}, {pipeline_mode = #tpu.pipeline_mode<synchronous>, transform_indices = @transform_12, window_bounds = array<i64: 1, 84>}, {pipeline_mode = #tpu.pipeline_mode<synchronous>, transform_indices = @transform_13, window_bounds = array<i64: 84, 128>}, {pipeline_mode = #tpu.pipeline_mode<synchronous>, transform_indices = @transform_14, window_bounds = array<i64: 1, 128>}, {transform_indices = @transform_15, window_bounds = array<i64: 8, 128>}]} {
    %c0 = arith.constant 0 : index
    %c0_0 = arith.constant 0 : index
    %0 = vector.load %arg3[%c0, %c0_0] : memref<1x168xf32, #tpu.memory_space<vmem>>, vector<1x168xf32>
    %1 = vector.shape_cast %0 : vector<1x168xf32> to vector<1x168xf32>
    %2 = vector.broadcast %1 : vector<1x168xf32> to vector<28x168xf32>
    %c0_1 = arith.constant 0 : index
    %c0_2 = arith.constant 0 : index
    %3 = vector.load %arg7[%c0_1, %c0_2] : memref<1x160xf32, #tpu.memory_space<vmem>>, vector<1x160xf32>
    %4 = vector.shape_cast %3 : vector<1x160xf32> to vector<1x160xf32>
    %5 = vector.broadcast %4 : vector<1x160xf32> to vector<10x160xf32>
    %c0_i32 = arith.constant 0 : i32
    %c8_i32 = arith.constant 8 : i32
    %6 = arith.addi %c0_i32, %c8_i32 : i32
    %c1_i32 = arith.constant 1 : i32
    scf.for %arg18 = %c0_i32 to %6 step %c1_i32  : i32 {
      %60 = arith.index_cast %arg18 : i32 to index
      %c0_48 = arith.constant 0 : index
      %c0_49 = arith.constant 0 : index
      %61 = vector.load %arg1[%60, %c0_48, %c0_49] : memref<8x32x32xf32, #tpu.memory_space<vmem>>, vector<1x32x32xf32>
      %62 = vector.shape_cast %61 : vector<1x32x32xf32> to vector<32x32xf32>
      %63 = vector.extract_strided_slice %62 {offsets = [0, 0], sizes = [28, 32], strides = [1, 1]} : vector<32x32xf32> to vector<28x32xf32>
      %64 = arith.truncf %63 : vector<28x32xf32> to vector<28x32xbf16>
      %c0_50 = arith.constant 0 : index
      %c0_51 = arith.constant 0 : index
      %c0_52 = arith.constant 0 : index
      %65 = vector.load %arg2[%c0_50, %c0_51, %c0_52] : memref<5x32x168xbf16, #tpu.memory_space<vmem>>, vector<1x32x168xbf16>
      %66 = vector.shape_cast %65 : vector<1x32x168xbf16> to vector<32x168xbf16>
      %cst_53 = arith.constant dense<0.000000e+00> : vector<28x168xf32>
      %67 = tpu.matmul %64, %66, %cst_53 {dimension_numbers = #tpu.dot_dimension_numbers<[1], [0], [0], [1], [0, 0, 1, 1], [], []>} : vector<28x32xbf16>, vector<32x168xbf16>, vector<28x168xf32> -> vector<28x168xf32>
      %68 = arith.addf %2, %67 : vector<28x168xf32>
      %69 = vector.extract_strided_slice %62 {offsets = [1, 0], sizes = [28, 32], strides = [1, 1]} : vector<32x32xf32> to vector<28x32xf32>
      %70 = arith.truncf %69 : vector<28x32xf32> to vector<28x32xbf16>
      %c1_54 = arith.constant 1 : index
      %c0_55 = arith.constant 0 : index
      %c0_56 = arith.constant 0 : index
      %71 = vector.load %arg2[%c1_54, %c0_55, %c0_56] : memref<5x32x168xbf16, #tpu.memory_space<vmem>>, vector<1x32x168xbf16>
      %72 = vector.shape_cast %71 : vector<1x32x168xbf16> to vector<32x168xbf16>
      %cst_57 = arith.constant dense<0.000000e+00> : vector<28x168xf32>
      %73 = tpu.matmul %70, %72, %cst_57 {dimension_numbers = #tpu.dot_dimension_numbers<[1], [0], [0], [1], [0, 0, 1, 1], [], []>} : vector<28x32xbf16>, vector<32x168xbf16>, vector<28x168xf32> -> vector<28x168xf32>
      %74 = arith.addf %68, %73 : vector<28x168xf32>
      %75 = vector.extract_strided_slice %62 {offsets = [2, 0], sizes = [28, 32], strides = [1, 1]} : vector<32x32xf32> to vector<28x32xf32>
      %76 = arith.truncf %75 : vector<28x32xf32> to vector<28x32xbf16>
      %c2_58 = arith.constant 2 : index
      %c0_59 = arith.constant 0 : index
      %c0_60 = arith.constant 0 : index
      %77 = vector.load %arg2[%c2_58, %c0_59, %c0_60] : memref<5x32x168xbf16, #tpu.memory_space<vmem>>, vector<1x32x168xbf16>
      %78 = vector.shape_cast %77 : vector<1x32x168xbf16> to vector<32x168xbf16>
      %cst_61 = arith.constant dense<0.000000e+00> : vector<28x168xf32>
      %79 = tpu.matmul %76, %78, %cst_61 {dimension_numbers = #tpu.dot_dimension_numbers<[1], [0], [0], [1], [0, 0, 1, 1], [], []>} : vector<28x32xbf16>, vector<32x168xbf16>, vector<28x168xf32> -> vector<28x168xf32>
      %80 = arith.addf %74, %79 : vector<28x168xf32>
      %81 = vector.extract_strided_slice %62 {offsets = [3, 0], sizes = [28, 32], strides = [1, 1]} : vector<32x32xf32> to vector<28x32xf32>
      %82 = arith.truncf %81 : vector<28x32xf32> to vector<28x32xbf16>
      %c3_62 = arith.constant 3 : index
      %c0_63 = arith.constant 0 : index
      %c0_64 = arith.constant 0 : index
      %83 = vector.load %arg2[%c3_62, %c0_63, %c0_64] : memref<5x32x168xbf16, #tpu.memory_space<vmem>>, vector<1x32x168xbf16>
      %84 = vector.shape_cast %83 : vector<1x32x168xbf16> to vector<32x168xbf16>
      %cst_65 = arith.constant dense<0.000000e+00> : vector<28x168xf32>
      %85 = tpu.matmul %82, %84, %cst_65 {dimension_numbers = #tpu.dot_dimension_numbers<[1], [0], [0], [1], [0, 0, 1, 1], [], []>} : vector<28x32xbf16>, vector<32x168xbf16>, vector<28x168xf32> -> vector<28x168xf32>
      %86 = arith.addf %80, %85 : vector<28x168xf32>
      %87 = vector.extract_strided_slice %62 {offsets = [4, 0], sizes = [28, 32], strides = [1, 1]} : vector<32x32xf32> to vector<28x32xf32>
      %88 = arith.truncf %87 : vector<28x32xf32> to vector<28x32xbf16>
      %c4_66 = arith.constant 4 : index
      %c0_67 = arith.constant 0 : index
      %c0_68 = arith.constant 0 : index
      %89 = vector.load %arg2[%c4_66, %c0_67, %c0_68] : memref<5x32x168xbf16, #tpu.memory_space<vmem>>, vector<1x32x168xbf16>
      %90 = vector.shape_cast %89 : vector<1x32x168xbf16> to vector<32x168xbf16>
      %cst_69 = arith.constant dense<0.000000e+00> : vector<28x168xf32>
      %91 = tpu.matmul %88, %90, %cst_69 {dimension_numbers = #tpu.dot_dimension_numbers<[1], [0], [0], [1], [0, 0, 1, 1], [], []>} : vector<28x32xbf16>, vector<32x168xbf16>, vector<28x168xf32> -> vector<28x168xf32>
      %92 = arith.addf %86, %91 : vector<28x168xf32>
      %93 = math.tanh %92 : vector<28x168xf32>
      %c0_70 = arith.constant 0 : index
      %c0_71 = arith.constant 0 : index
      %94 = vector.load %arg4[%c0_70, %c0_71] : memref<14x28xbf16, #tpu.memory_space<vmem>>, vector<14x28xbf16>
      %95 = arith.truncf %93 : vector<28x168xf32> to vector<28x168xbf16>
      %cst_72 = arith.constant dense<0.000000e+00> : vector<14x168xf32>
      %96 = tpu.matmul %94, %95, %cst_72 {dimension_numbers = #tpu.dot_dimension_numbers<[1], [0], [0], [1], [0, 0, 1, 1], [], []>} : vector<14x28xbf16>, vector<28x168xbf16>, vector<14x168xf32> -> vector<14x168xf32>
      %97 = arith.truncf %96 : vector<14x168xf32> to vector<14x168xbf16>
      %c0_73 = arith.constant 0 : index
      %c0_74 = arith.constant 0 : index
      %98 = vector.load %arg5[%c0_73, %c0_74] : memref<168x84xbf16, #tpu.memory_space<vmem>>, vector<168x84xbf16>
      %cst_75 = arith.constant dense<0.000000e+00> : vector<14x84xf32>
      %99 = tpu.matmul %97, %98, %cst_75 {dimension_numbers = #tpu.dot_dimension_numbers<[1], [0], [0], [1], [0, 0, 1, 1], [], []>} : vector<14x168xbf16>, vector<168x84xbf16>, vector<14x84xf32> -> vector<14x84xf32>
      %100 = vector.extract_strided_slice %99 {offsets = [0, 0], sizes = [10, 84], strides = [1, 1]} : vector<14x84xf32> to vector<10x84xf32>
      %101 = arith.truncf %100 : vector<10x84xf32> to vector<10x84xbf16>
      %c0_76 = arith.constant 0 : index
      %c0_77 = arith.constant 0 : index
      %c0_78 = arith.constant 0 : index
      %102 = vector.load %arg6[%c0_76, %c0_77, %c0_78] : memref<5x84x160xbf16, #tpu.memory_space<vmem>>, vector<1x84x160xbf16>
      %103 = vector.shape_cast %102 : vector<1x84x160xbf16> to vector<84x160xbf16>
      %cst_79 = arith.constant dense<0.000000e+00> : vector<10x160xf32>
      %104 = tpu.matmul %101, %103, %cst_79 {dimension_numbers = #tpu.dot_dimension_numbers<[1], [0], [0], [1], [0, 0, 1, 1], [], []>} : vector<10x84xbf16>, vector<84x160xbf16>, vector<10x160xf32> -> vector<10x160xf32>
      %105 = arith.addf %5, %104 : vector<10x160xf32>
      %106 = vector.extract_strided_slice %99 {offsets = [1, 0], sizes = [10, 84], strides = [1, 1]} : vector<14x84xf32> to vector<10x84xf32>
      %107 = arith.truncf %106 : vector<10x84xf32> to vector<10x84xbf16>
      %c1_80 = arith.constant 1 : index
      %c0_81 = arith.constant 0 : index
      %c0_82 = arith.constant 0 : index
      %108 = vector.load %arg6[%c1_80, %c0_81, %c0_82] : memref<5x84x160xbf16, #tpu.memory_space<vmem>>, vector<1x84x160xbf16>
      %109 = vector.shape_cast %108 : vector<1x84x160xbf16> to vector<84x160xbf16>
      %cst_83 = arith.constant dense<0.000000e+00> : vector<10x160xf32>
      %110 = tpu.matmul %107, %109, %cst_83 {dimension_numbers = #tpu.dot_dimension_numbers<[1], [0], [0], [1], [0, 0, 1, 1], [], []>} : vector<10x84xbf16>, vector<84x160xbf16>, vector<10x160xf32> -> vector<10x160xf32>
      %111 = arith.addf %105, %110 : vector<10x160xf32>
      %112 = vector.extract_strided_slice %99 {offsets = [2, 0], sizes = [10, 84], strides = [1, 1]} : vector<14x84xf32> to vector<10x84xf32>
      %113 = arith.truncf %112 : vector<10x84xf32> to vector<10x84xbf16>
      %c2_84 = arith.constant 2 : index
      %c0_85 = arith.constant 0 : index
      %c0_86 = arith.constant 0 : index
      %114 = vector.load %arg6[%c2_84, %c0_85, %c0_86] : memref<5x84x160xbf16, #tpu.memory_space<vmem>>, vector<1x84x160xbf16>
      %115 = vector.shape_cast %114 : vector<1x84x160xbf16> to vector<84x160xbf16>
      %cst_87 = arith.constant dense<0.000000e+00> : vector<10x160xf32>
      %116 = tpu.matmul %113, %115, %cst_87 {dimension_numbers = #tpu.dot_dimension_numbers<[1], [0], [0], [1], [0, 0, 1, 1], [], []>} : vector<10x84xbf16>, vector<84x160xbf16>, vector<10x160xf32> -> vector<10x160xf32>
      %117 = arith.addf %111, %116 : vector<10x160xf32>
      %118 = vector.extract_strided_slice %99 {offsets = [3, 0], sizes = [10, 84], strides = [1, 1]} : vector<14x84xf32> to vector<10x84xf32>
      %119 = arith.truncf %118 : vector<10x84xf32> to vector<10x84xbf16>
      %c3_88 = arith.constant 3 : index
      %c0_89 = arith.constant 0 : index
      %c0_90 = arith.constant 0 : index
      %120 = vector.load %arg6[%c3_88, %c0_89, %c0_90] : memref<5x84x160xbf16, #tpu.memory_space<vmem>>, vector<1x84x160xbf16>
      %121 = vector.shape_cast %120 : vector<1x84x160xbf16> to vector<84x160xbf16>
      %cst_91 = arith.constant dense<0.000000e+00> : vector<10x160xf32>
      %122 = tpu.matmul %119, %121, %cst_91 {dimension_numbers = #tpu.dot_dimension_numbers<[1], [0], [0], [1], [0, 0, 1, 1], [], []>} : vector<10x84xbf16>, vector<84x160xbf16>, vector<10x160xf32> -> vector<10x160xf32>
      %123 = arith.addf %117, %122 : vector<10x160xf32>
      %124 = vector.extract_strided_slice %99 {offsets = [4, 0], sizes = [10, 84], strides = [1, 1]} : vector<14x84xf32> to vector<10x84xf32>
      %125 = arith.truncf %124 : vector<10x84xf32> to vector<10x84xbf16>
      %c4_92 = arith.constant 4 : index
      %c0_93 = arith.constant 0 : index
      %c0_94 = arith.constant 0 : index
      %126 = vector.load %arg6[%c4_92, %c0_93, %c0_94] : memref<5x84x160xbf16, #tpu.memory_space<vmem>>, vector<1x84x160xbf16>
      %127 = vector.shape_cast %126 : vector<1x84x160xbf16> to vector<84x160xbf16>
      %cst_95 = arith.constant dense<0.000000e+00> : vector<10x160xf32>
      %128 = tpu.matmul %125, %127, %cst_95 {dimension_numbers = #tpu.dot_dimension_numbers<[1], [0], [0], [1], [0, 0, 1, 1], [], []>} : vector<10x84xbf16>, vector<84x160xbf16>, vector<10x160xf32> -> vector<10x160xf32>
      %129 = arith.addf %123, %128 : vector<10x160xf32>
      %130 = math.tanh %129 : vector<10x160xf32>
      %c0_96 = arith.constant 0 : index
      %c0_97 = arith.constant 0 : index
      %131 = vector.load %arg8[%c0_96, %c0_97] : memref<5x10xbf16, #tpu.memory_space<vmem>>, vector<5x10xbf16>
      %132 = arith.truncf %130 : vector<10x160xf32> to vector<10x160xbf16>
      %cst_98 = arith.constant dense<0.000000e+00> : vector<5x160xf32>
      %133 = tpu.matmul %131, %132, %cst_98 {dimension_numbers = #tpu.dot_dimension_numbers<[1], [0], [0], [1], [0, 0, 1, 1], [], []>} : vector<5x10xbf16>, vector<10x160xbf16>, vector<5x160xf32> -> vector<5x160xf32>
      %134 = arith.truncf %133 : vector<5x160xf32> to vector<5x160xbf16>
      %c0_99 = arith.constant 0 : index
      %c0_100 = arith.constant 0 : index
      %135 = vector.load %arg9[%c0_99, %c0_100] : memref<160x80xbf16, #tpu.memory_space<vmem>>, vector<160x80xbf16>
      %cst_101 = arith.constant dense<0.000000e+00> : vector<5x80xf32>
      %136 = tpu.matmul %134, %135, %cst_101 {dimension_numbers = #tpu.dot_dimension_numbers<[1], [0], [0], [1], [0, 0, 1, 1], [], []>} : vector<5x160xbf16>, vector<160x80xbf16>, vector<5x80xf32> -> vector<5x80xf32>
      %137 = vector.extract_strided_slice %136 {offsets = [0, 0], sizes = [1, 80], strides = [1, 1]} : vector<5x80xf32> to vector<1x80xf32>
      %c0_102 = arith.constant 0 : index
      %138 = arith.index_cast %arg18 : i32 to index
      %c0_103 = arith.constant 0 : index
      %139 = vector.load %arg17[%c0_102, %138, %c0_103] : memref<5x8x80xf32, #tpu.memory_space<vmem>>, vector<1x1x80xf32>
      %140 = vector.shape_cast %139 : vector<1x1x80xf32> to vector<1x80xf32>
      %141 = vector.shape_cast %137 : vector<1x80xf32> to vector<1x1x80xf32>
      tpu.vector_store %arg17[%c0_102, %138, %c0_103], %141 {strides = array<i32>} : memref<5x8x80xf32, #tpu.memory_space<vmem>>, vector<1x1x80xf32>,
      %142 = vector.extract_strided_slice %136 {offsets = [1, 0], sizes = [1, 80], strides = [1, 1]} : vector<5x80xf32> to vector<1x80xf32>
      %c1_104 = arith.constant 1 : index
      %143 = arith.index_cast %arg18 : i32 to index
      %c0_105 = arith.constant 0 : index
      %144 = vector.load %arg17[%c1_104, %143, %c0_105] : memref<5x8x80xf32, #tpu.memory_space<vmem>>, vector<1x1x80xf32>
      %145 = vector.shape_cast %144 : vector<1x1x80xf32> to vector<1x80xf32>
      %146 = vector.shape_cast %142 : vector<1x80xf32> to vector<1x1x80xf32>
      tpu.vector_store %arg17[%c1_104, %143, %c0_105], %146 {strides = array<i32>} : memref<5x8x80xf32, #tpu.memory_space<vmem>>, vector<1x1x80xf32>,
      %147 = vector.extract_strided_slice %136 {offsets = [2, 0], sizes = [1, 80], strides = [1, 1]} : vector<5x80xf32> to vector<1x80xf32>
      %c2_106 = arith.constant 2 : index
      %148 = arith.index_cast %arg18 : i32 to index
      %c0_107 = arith.constant 0 : index
      %149 = vector.load %arg17[%c2_106, %148, %c0_107] : memref<5x8x80xf32, #tpu.memory_space<vmem>>, vector<1x1x80xf32>
      %150 = vector.shape_cast %149 : vector<1x1x80xf32> to vector<1x80xf32>
      %151 = vector.shape_cast %147 : vector<1x80xf32> to vector<1x1x80xf32>
      tpu.vector_store %arg17[%c2_106, %148, %c0_107], %151 {strides = array<i32>} : memref<5x8x80xf32, #tpu.memory_space<vmem>>, vector<1x1x80xf32>,
      %152 = vector.extract_strided_slice %136 {offsets = [3, 0], sizes = [1, 80], strides = [1, 1]} : vector<5x80xf32> to vector<1x80xf32>
      %c3_108 = arith.constant 3 : index
      %153 = arith.index_cast %arg18 : i32 to index
      %c0_109 = arith.constant 0 : index
      %154 = vector.load %arg17[%c3_108, %153, %c0_109] : memref<5x8x80xf32, #tpu.memory_space<vmem>>, vector<1x1x80xf32>
      %155 = vector.shape_cast %154 : vector<1x1x80xf32> to vector<1x80xf32>
      %156 = vector.shape_cast %152 : vector<1x80xf32> to vector<1x1x80xf32>
      tpu.vector_store %arg17[%c3_108, %153, %c0_109], %156 {strides = array<i32>} : memref<5x8x80xf32, #tpu.memory_space<vmem>>, vector<1x1x80xf32>,
      %157 = vector.extract_strided_slice %136 {offsets = [4, 0], sizes = [1, 80], strides = [1, 1]} : vector<5x80xf32> to vector<1x80xf32>
      %c4_110 = arith.constant 4 : index
      %158 = arith.index_cast %arg18 : i32 to index
      %c0_111 = arith.constant 0 : index
      %159 = vector.load %arg17[%c4_110, %158, %c0_111] : memref<5x8x80xf32, #tpu.memory_space<vmem>>, vector<1x1x80xf32>
      %160 = vector.shape_cast %159 : vector<1x1x80xf32> to vector<1x80xf32>
      %161 = vector.shape_cast %157 : vector<1x80xf32> to vector<1x1x80xf32>
      tpu.vector_store %arg17[%c4_110, %158, %c0_111], %161 {strides = array<i32>} : memref<5x8x80xf32, #tpu.memory_space<vmem>>, vector<1x1x80xf32>,
    }
    %c8_i32_3 = arith.constant 8 : i32
    %c0_4 = arith.constant 0 : index
    %c0_5 = arith.constant 0 : index
    %7 = vector.load %arg11[%c0_4, %c0_5] : memref<1x120xf32, #tpu.memory_space<vmem>>, vector<1x120xf32>
    %8 = vector.shape_cast %7 : vector<1x120xf32> to vector<1x120xf32>
    %9 = vector.broadcast %8 : vector<1x120xf32> to vector<8x120xf32>
    %c0_6 = arith.constant 0 : index
    %c0_7 = arith.constant 0 : index
    %c0_8 = arith.constant 0 : index
    %10 = vector.load %arg17[%c0_6, %c0_7, %c0_8] : memref<5x8x80xf32, #tpu.memory_space<vmem>>, vector<1x8x80xf32>
    %11 = vector.shape_cast %10 : vector<1x8x80xf32> to vector<8x80xf32>
    %12 = arith.truncf %11 : vector<8x80xf32> to vector<8x80xbf16>
    %c0_9 = arith.constant 0 : index
    %c0_10 = arith.constant 0 : index
    %c0_11 = arith.constant 0 : index
    %13 = vector.load %arg10[%c0_9, %c0_10, %c0_11] : memref<5x80x120xbf16, #tpu.memory_space<vmem>>, vector<1x80x120xbf16>
    %14 = vector.shape_cast %13 : vector<1x80x120xbf16> to vector<80x120xbf16>
    %cst = arith.constant dense<0.000000e+00> : vector<8x120xf32>
    %15 = tpu.matmul %12, %14, %cst {dimension_numbers = #tpu.dot_dimension_numbers<[1], [0], [0], [1], [0, 0, 1, 1], [], []>} : vector<8x80xbf16>, vector<80x120xbf16>, vector<8x120xf32> -> vector<8x120xf32>
    %16 = arith.addf %9, %15 : vector<8x120xf32>
    %c1 = arith.constant 1 : index
    %c0_12 = arith.constant 0 : index
    %c0_13 = arith.constant 0 : index
    %17 = vector.load %arg17[%c1, %c0_12, %c0_13] : memref<5x8x80xf32, #tpu.memory_space<vmem>>, vector<1x8x80xf32>
    %18 = vector.shape_cast %17 : vector<1x8x80xf32> to vector<8x80xf32>
    %19 = arith.truncf %18 : vector<8x80xf32> to vector<8x80xbf16>
    %c1_14 = arith.constant 1 : index
    %c0_15 = arith.constant 0 : index
    %c0_16 = arith.constant 0 : index
    %20 = vector.load %arg10[%c1_14, %c0_15, %c0_16] : memref<5x80x120xbf16, #tpu.memory_space<vmem>>, vector<1x80x120xbf16>
    %21 = vector.shape_cast %20 : vector<1x80x120xbf16> to vector<80x120xbf16>
    %cst_17 = arith.constant dense<0.000000e+00> : vector<8x120xf32>
    %22 = tpu.matmul %19, %21, %cst_17 {dimension_numbers = #tpu.dot_dimension_numbers<[1], [0], [0], [1], [0, 0, 1, 1], [], []>} : vector<8x80xbf16>, vector<80x120xbf16>, vector<8x120xf32> -> vector<8x120xf32>
    %23 = arith.addf %16, %22 : vector<8x120xf32>
    %c2 = arith.constant 2 : index
    %c0_18 = arith.constant 0 : index
    %c0_19 = arith.constant 0 : index
    %24 = vector.load %arg17[%c2, %c0_18, %c0_19] : memref<5x8x80xf32, #tpu.memory_space<vmem>>, vector<1x8x80xf32>
    %25 = vector.shape_cast %24 : vector<1x8x80xf32> to vector<8x80xf32>
    %26 = arith.truncf %25 : vector<8x80xf32> to vector<8x80xbf16>
    %c2_20 = arith.constant 2 : index
    %c0_21 = arith.constant 0 : index
    %c0_22 = arith.constant 0 : index
    %27 = vector.load %arg10[%c2_20, %c0_21, %c0_22] : memref<5x80x120xbf16, #tpu.memory_space<vmem>>, vector<1x80x120xbf16>
    %28 = vector.shape_cast %27 : vector<1x80x120xbf16> to vector<80x120xbf16>
    %cst_23 = arith.constant dense<0.000000e+00> : vector<8x120xf32>
    %29 = tpu.matmul %26, %28, %cst_23 {dimension_numbers = #tpu.dot_dimension_numbers<[1], [0], [0], [1], [0, 0, 1, 1], [], []>} : vector<8x80xbf16>, vector<80x120xbf16>, vector<8x120xf32> -> vector<8x120xf32>
    %30 = arith.addf %23, %29 : vector<8x120xf32>
    %c3 = arith.constant 3 : index
    %c0_24 = arith.constant 0 : index
    %c0_25 = arith.constant 0 : index
    %31 = vector.load %arg17[%c3, %c0_24, %c0_25] : memref<5x8x80xf32, #tpu.memory_space<vmem>>, vector<1x8x80xf32>
    %32 = vector.shape_cast %31 : vector<1x8x80xf32> to vector<8x80xf32>
    %33 = arith.truncf %32 : vector<8x80xf32> to vector<8x80xbf16>
    %c3_26 = arith.constant 3 : index
    %c0_27 = arith.constant 0 : index
    %c0_28 = arith.constant 0 : index
    %34 = vector.load %arg10[%c3_26, %c0_27, %c0_28] : memref<5x80x120xbf16, #tpu.memory_space<vmem>>, vector<1x80x120xbf16>
    %35 = vector.shape_cast %34 : vector<1x80x120xbf16> to vector<80x120xbf16>
    %cst_29 = arith.constant dense<0.000000e+00> : vector<8x120xf32>
    %36 = tpu.matmul %33, %35, %cst_29 {dimension_numbers = #tpu.dot_dimension_numbers<[1], [0], [0], [1], [0, 0, 1, 1], [], []>} : vector<8x80xbf16>, vector<80x120xbf16>, vector<8x120xf32> -> vector<8x120xf32>
    %37 = arith.addf %30, %36 : vector<8x120xf32>
    %c4 = arith.constant 4 : index
    %c0_30 = arith.constant 0 : index
    %c0_31 = arith.constant 0 : index
    %38 = vector.load %arg17[%c4, %c0_30, %c0_31] : memref<5x8x80xf32, #tpu.memory_space<vmem>>, vector<1x8x80xf32>
    %39 = vector.shape_cast %38 : vector<1x8x80xf32> to vector<8x80xf32>
    %40 = arith.truncf %39 : vector<8x80xf32> to vector<8x80xbf16>
    %c4_32 = arith.constant 4 : index
    %c0_33 = arith.constant 0 : index
    %c0_34 = arith.constant 0 : index
    %41 = vector.load %arg10[%c4_32, %c0_33, %c0_34] : memref<5x80x120xbf16, #tpu.memory_space<vmem>>, vector<1x80x120xbf16>
    %42 = vector.shape_cast %41 : vector<1x80x120xbf16> to vector<80x120xbf16>
    %cst_35 = arith.constant dense<0.000000e+00> : vector<8x120xf32>
    %43 = tpu.matmul %40, %42, %cst_35 {dimension_numbers = #tpu.dot_dimension_numbers<[1], [0], [0], [1], [0, 0, 1, 1], [], []>} : vector<8x80xbf16>, vector<80x120xbf16>, vector<8x120xf32> -> vector<8x120xf32>
    %44 = arith.addf %37, %43 : vector<8x120xf32>
    %45 = math.tanh %44 : vector<8x120xf32>
    %46 = arith.truncf %45 : vector<8x120xf32> to vector<8x120xbf16>
    %c0_36 = arith.constant 0 : index
    %c0_37 = arith.constant 0 : index
    %47 = vector.load %arg12[%c0_36, %c0_37] : memref<120x84xbf16, #tpu.memory_space<vmem>>, vector<120x84xbf16>
    %cst_38 = arith.constant dense<0.000000e+00> : vector<8x84xf32>
    %48 = tpu.matmul %46, %47, %cst_38 {dimension_numbers = #tpu.dot_dimension_numbers<[1], [0], [0], [1], [0, 0, 1, 1], [], []>} : vector<8x120xbf16>, vector<120x84xbf16>, vector<8x84xf32> -> vector<8x84xf32>
    %c0_39 = arith.constant 0 : index
    %c0_40 = arith.constant 0 : index
    %49 = vector.load %arg13[%c0_39, %c0_40] : memref<1x84xf32, #tpu.memory_space<vmem>>, vector<1x84xf32>
    %50 = vector.broadcast %49 : vector<1x84xf32> to vector<8x84xf32>
    %51 = arith.addf %48, %50 : vector<8x84xf32>
    %52 = math.tanh %51 : vector<8x84xf32>
    %53 = arith.truncf %52 : vector<8x84xf32> to vector<8x84xbf16>
    %c0_41 = arith.constant 0 : index
    %c0_42 = arith.constant 0 : index
    %54 = vector.load %arg14[%c0_41, %c0_42] : memref<84x128xbf16, #tpu.memory_space<vmem>>, vector<84x128xbf16>
    %cst_43 = arith.constant dense<0.000000e+00> : vector<8x128xf32>
    %55 = tpu.matmul %53, %54, %cst_43 {dimension_numbers = #tpu.dot_dimension_numbers<[1], [0], [0], [1], [0, 0, 1, 1], [], []>} : vector<8x84xbf16>, vector<84x128xbf16>, vector<8x128xf32> -> vector<8x128xf32>
    %c0_44 = arith.constant 0 : index
    %c0_45 = arith.constant 0 : index
    %56 = vector.load %arg15[%c0_44, %c0_45] : memref<1x128xf32, #tpu.memory_space<vmem>>, vector<1x128xf32>
    %57 = vector.broadcast %56 : vector<1x128xf32> to vector<8x128xf32>
    %58 = arith.addf %55, %57 : vector<8x128xf32>
    %c0_46 = arith.constant 0 : index
    %c0_47 = arith.constant 0 : index
    %59 = vector.load %arg16[%c0_46, %c0_47] : memref<8x128xf32, #tpu.memory_space<vmem>>, vector<8x128xf32>
    tpu.vector_store %arg16[%c0_46, %c0_47], %58 {strides = array<i32>} : memref<8x128xf32, #tpu.memory_space<vmem>>, vector<8x128xf32>,
    return
  }
  func.func @transform_0(%arg0: i32) -> (i32, i32, i32) {
    %c0_i32 = arith.constant 0 : i32
    %c0_i32_0 = arith.constant 0 : i32
    %c0_i32_1 = arith.constant 0 : i32
    return %arg0, %c0_i32, %c0_i32_0 : i32, i32, i32
  }
  func.func @transform_1(%arg0: i32) -> (i32, i32, i32) {
    %c0_i32 = arith.constant 0 : i32
    %c0_i32_0 = arith.constant 0 : i32
    %c0_i32_1 = arith.constant 0 : i32
    %c0_i32_2 = arith.constant 0 : i32
    return %c0_i32, %c0_i32_0, %c0_i32_1 : i32, i32, i32
  }
  func.func @transform_2(%arg0: i32) -> (i32, i32) {
    %c0_i32 = arith.constant 0 : i32
    %c0_i32_0 = arith.constant 0 : i32
    %c0_i32_1 = arith.constant 0 : i32
    return %c0_i32, %c0_i32_0 : i32, i32
  }
  func.func @transform_3(%arg0: i32) -> (i32, i32) {
    %c0_i32 = arith.constant 0 : i32
    %c0_i32_0 = arith.constant 0 : i32
    %c0_i32_1 = arith.constant 0 : i32
    return %c0_i32, %c0_i32_0 : i32, i32
  }
  func.func @transform_4(%arg0: i32) -> (i32, i32) {
    %c0_i32 = arith.constant 0 : i32
    %c0_i32_0 = arith.constant 0 : i32
    %c0_i32_1 = arith.constant 0 : i32
    return %c0_i32, %c0_i32_0 : i32, i32
  }
  func.func @transform_5(%arg0: i32) -> (i32, i32, i32) {
    %c0_i32 = arith.constant 0 : i32
    %c0_i32_0 = arith.constant 0 : i32
    %c0_i32_1 = arith.constant 0 : i32
    %c0_i32_2 = arith.constant 0 : i32
    return %c0_i32, %c0_i32_0, %c0_i32_1 : i32, i32, i32
  }
  func.func @transform_6(%arg0: i32) -> (i32, i32) {
    %c0_i32 = arith.constant 0 : i32
    %c0_i32_0 = arith.constant 0 : i32
    %c0_i32_1 = arith.constant 0 : i32
    return %c0_i32, %c0_i32_0 : i32, i32
  }
  func.func @transform_7(%arg0: i32) -> (i32, i32) {
    %c0_i32 = arith.constant 0 : i32
    %c0_i32_0 = arith.constant 0 : i32
    %c0_i32_1 = arith.constant 0 : i32
    return %c0_i32, %c0_i32_0 : i32, i32
  }
  func.func @transform_8(%arg0: i32) -> (i32, i32) {
    %c0_i32 = arith.constant 0 : i32
    %c0_i32_0 = arith.constant 0 : i32
    %c0_i32_1 = arith.constant 0 : i32
    return %c0_i32, %c0_i32_0 : i32, i32
  }
  func.func @transform_9(%arg0: i32) -> (i32, i32, i32) {
    %c0_i32 = arith.constant 0 : i32
    %c0_i32_0 = arith.constant 0 : i32
    %c0_i32_1 = arith.constant 0 : i32
    %c0_i32_2 = arith.constant 0 : i32
    return %c0_i32, %c0_i32_0, %c0_i32_1 : i32, i32, i32
  }
  func.func @transform_10(%arg0: i32) -> (i32, i32) {
    %c0_i32 = arith.constant 0 : i32
    %c0_i32_0 = arith.constant 0 : i32
    %c0_i32_1 = arith.constant 0 : i32
    return %c0_i32, %c0_i32_0 : i32, i32
  }
  func.func @transform_11(%arg0: i32) -> (i32, i32) {
    %c0_i32 = arith.constant 0 : i32
    %c0_i32_0 = arith.constant 0 : i32
    %c0_i32_1 = arith.constant 0 : i32
    return %c0_i32, %c0_i32_0 : i32, i32
  }
  func.func @transform_12(%arg0: i32) -> (i32, i32) {
    %c0_i32 = arith.constant 0 : i32
    %c0_i32_0 = arith.constant 0 : i32
    %c0_i32_1 = arith.constant 0 : i32
    return %c0_i32, %c0_i32_0 : i32, i32
  }
  func.func @transform_13(%arg0: i32) -> (i32, i32) {
    %c0_i32 = arith.constant 0 : i32
    %c0_i32_0 = arith.constant 0 : i32
    %c0_i32_1 = arith.constant 0 : i32
    return %c0_i32, %c0_i32_0 : i32, i32
  }
  func.func @transform_14(%arg0: i32) -> (i32, i32) {
    %c0_i32 = arith.constant 0 : i32
    %c0_i32_0 = arith.constant 0 : i32
    %c0_i32_1 = arith.constant 0 : i32
    return %c0_i32, %c0_i32_0 : i32, i32
  }
  func.func @transform_15(%arg0: i32) -> (i32, i32) {
    %c0_i32 = arith.constant 0 : i32
    %c0_i32_0 = arith.constant 0 : i32
    return %arg0, %c0_i32 : i32, i32
  }
}

</mosaic_0001>

<llo_original>
// kernel: lenet5_forward.1
$region0: #{lenet5_forward.1}
  #allocation0 [shape = 'u32[]', space=smem, size = 0x4, offset = 0x4, fixed_abs, tag = 'smem constant byte address 0x4 - core index']
  #allocation1 [shape = 'u32[144,128]{1,0:T(1,128)}', space=vmem, size = 0x12000, scoped, tag = 'internal scratch']
  #allocation2 [shape = 'f32[5,8,80]{2,1,0:T(8,128)}', space=vmem, size = 0x5000, scoped, tag = 'scratch operand']
  %s0 = inlined_call_operand.vmem [shape: f32[8,32,32], index: 0, kind: input, shape index: {}]
  %s1 = inlined_call_operand.vmem [shape: bf16[5,32,168], index: 1, kind: input, shape index: {}]
  %s2 = inlined_call_operand.vmem [shape: f32[1,168], index: 2, kind: input, shape index: {}]
  %s3 = inlined_call_operand.vmem [shape: bf16[14,28], index: 3, kind: input, shape index: {}]
  %s4 = inlined_call_operand.vmem [shape: bf16[168,84], index: 4, kind: input, shape index: {}]
  %s5 = inlined_call_operand.vmem [shape: bf16[5,84,160], index: 5, kind: input, shape index: {}]
  %s6 = inlined_call_operand.vmem [shape: f32[1,160], index: 6, kind: input, shape index: {}]
  %s7 = inlined_call_operand.vmem [shape: bf16[5,10], index: 7, kind: input, shape index: {}]
  %s8 = inlined_call_operand.vmem [shape: bf16[160,80], index: 8, kind: input, shape index: {}]
  %s9 = inlined_call_operand.vmem [shape: bf16[5,80,120], index: 9, kind: input, shape index: {}]
  %s10 = inlined_call_operand.vmem [shape: f32[1,120], index: 10, kind: input, shape index: {}]
  %s11 = inlined_call_operand.vmem [shape: bf16[120,84], index: 11, kind: input, shape index: {}]
  %s12 = inlined_call_operand.vmem [shape: f32[1,84], index: 12, kind: input, shape index: {}]
  %s13 = inlined_call_operand.vmem [shape: bf16[84,128], index: 13, kind: input, shape index: {}]
  %s14 = inlined_call_operand.vmem [shape: f32[1,128], index: 14, kind: input, shape index: {}]
  %s15 = inlined_call_operand.vmem [shape: f32[8,128], index: 15, kind: output, shape index: {}]
  %s16 = sld [smem:[#allocation0]]
  $region77: #{lenet5_forward.1} parent=0
    _
  %s18 = ssub.s32 1, %s16
  %s19 = scalar_select 0, %s18, %s16
  // Predicated region
  $region2: #{lenet5_forward.1} parent=0 // pred_check
    _
  $region3: #{lenet5_forward.1} parent=0 // pred_check_branch
    %21 = sbr.rel (0) target = $region5
  $region4: #{lenet5_forward.1} parent=0 // pred_region
    _
  $region5: #{lenet5_forward.1} parent=0 // pred_fallthru
    _
  // Predicated region
  $region6: #{lenet5_forward.1} parent=0 // pred_check
    _
  $region7: #{lenet5_forward.1} parent=0 // pred_check_branch
    %23 = sbr.rel (0) target = $region9
  $region8: #{lenet5_forward.1} parent=0 // pred_region
    _
  $region9: #{lenet5_forward.1} parent=0 // pred_fallthru
    _
  // Predicated region
  $region10: #{lenet5_forward.1} parent=0 // pred_check
    _
  $region11: #{lenet5_forward.1} parent=0 // pred_check_branch
    %25 = sbr.rel (0) target = $region13
  $region12: #{lenet5_forward.1} parent=0 // pred_region
    _
  $region13: #{lenet5_forward.1} parent=0 // pred_fallthru
    _
  // Predicated region
  $region14: #{lenet5_forward.1} parent=0 // pred_check
    _
  $region15: #{lenet5_forward.1} parent=0 // pred_check_branch
    %27 = sbr.rel (0) target = $region17
  $region16: #{lenet5_forward.1} parent=0 // pred_region
    _
  $region17: #{lenet5_forward.1} parent=0 // pred_fallthru
    _
  // Predicated region
  $region18: #{lenet5_forward.1} parent=0 // pred_check
    _
  $region19: #{lenet5_forward.1} parent=0 // pred_check_branch
    %29 = sbr.rel (0) target = $region21
  $region20: #{lenet5_forward.1} parent=0 // pred_region
    _
  $region21: #{lenet5_forward.1} parent=0 // pred_fallthru
    _
  // Predicated region
  $region22: #{lenet5_forward.1} parent=0 // pred_check
    _
  $region23: #{lenet5_forward.1} parent=0 // pred_check_branch
    %31 = sbr.rel (0) target = $region25
  $region24: #{lenet5_forward.1} parent=0 // pred_region
    _
  $region25: #{lenet5_forward.1} parent=0 // pred_fallthru
    _
  // Predicated region
  $region26: #{lenet5_forward.1} parent=0 // pred_check
    _
  $region27: #{lenet5_forward.1} parent=0 // pred_check_branch
    %33 = sbr.rel (0) target = $region29
  $region28: #{lenet5_forward.1} parent=0 // pred_region
    _
  $region29: #{lenet5_forward.1} parent=0 // pred_fallthru
    _
  // Predicated region
  $region30: #{lenet5_forward.1} parent=0 // pred_check
    _
  $region31: #{lenet5_forward.1} parent=0 // pred_check_branch
    %35 = sbr.rel (0) target = $region33
  $region32: #{lenet5_forward.1} parent=0 // pred_region
    _
  $region33: #{lenet5_forward.1} parent=0 // pred_fallthru
    _
  // Predicated region
  $region34: #{lenet5_forward.1} parent=0 // pred_check
    _
  $region35: #{lenet5_forward.1} parent=0 // pred_check_branch
    %37 = sbr.rel (0) target = $region37
  $region36: #{lenet5_forward.1} parent=0 // pred_region
    _
  $region37: #{lenet5_forward.1} parent=0 // pred_fallthru
    _
  // Predicated region
  $region38: #{lenet5_forward.1} parent=0 // pred_check
    _
  $region39: #{lenet5_forward.1} parent=0 // pred_check_branch
    %39 = sbr.rel (0) target = $region41
  $region40: #{lenet5_forward.1} parent=0 // pred_region
    _
  $region41: #{lenet5_forward.1} parent=0 // pred_fallthru
    _
  // Predicated region
  $region42: #{lenet5_forward.1} parent=0 // pred_check
    _
  $region43: #{lenet5_forward.1} parent=0 // pred_check_branch
    %41 = sbr.rel (0) target = $region45
  $region44: #{lenet5_forward.1} parent=0 // pred_region
    _
  $region45: #{lenet5_forward.1} parent=0 // pred_fallthru
    _
  // Predicated region
  $region46: #{lenet5_forward.1} parent=0 // pred_check
    _
  $region47: #{lenet5_forward.1} parent=0 // pred_check_branch
    %43 = sbr.rel (0) target = $region49
  $region48: #{lenet5_forward.1} parent=0 // pred_region
    _
  $region49: #{lenet5_forward.1} parent=0 // pred_fallthru
    _
  // Predicated region
  $region50: #{lenet5_forward.1} parent=0 // pred_check
    _
  $region51: #{lenet5_forward.1} parent=0 // pred_check_branch
    %45 = sbr.rel (0) target = $region53
  $region52: #{lenet5_forward.1} parent=0 // pred_region
    _
  $region53: #{lenet5_forward.1} parent=0 // pred_fallthru
    _
  // Predicated region
  $region54: #{lenet5_forward.1} parent=0 // pred_check
    _
  $region55: #{lenet5_forward.1} parent=0 // pred_check_branch
    %47 = sbr.rel (0) target = $region57
  $region56: #{lenet5_forward.1} parent=0 // pred_region
    _
  $region57: #{lenet5_forward.1} parent=0 // pred_fallthru
    _
  // Predicated region
  $region58: #{lenet5_forward.1} parent=0 // pred_check
    _
  $region59: #{lenet5_forward.1} parent=0 // pred_check_branch
    %49 = sbr.rel (0) target = $region61
  $region60: #{lenet5_forward.1} parent=0 // pred_region
    _
  $region61: #{lenet5_forward.1} parent=0 // pred_fallthru
    _
  %v51 = vld [vmem:[%s2] sm:$0x3]
  %v53 = vlaneseq
  %v54 = vshrl.u32 %v53, 7
  %v55 = vsub.s32 0, %v54
  %v56 = vrot.slane %v51, %v55
  %v57 = vlaneseq
  %v58 = vshrl.u32 %v57, 7
  %v59 = vsub.s32 1, %v58
  %v60 = vrot.slane %v51, %v59
  %v63 = vld [vmem:[%s6] sm:$0x3]
  %v65 = vlaneseq
  %v66 = vshrl.u32 %v65, 7
  %v67 = vsub.s32 0, %v66
  %v68 = vrot.slane %v63, %v67
  %v69 = vlaneseq
  %v70 = vshrl.u32 %v69, 7
  %v71 = vsub.s32 1, %v70
  %v72 = vrot.slane %v63, %v71
  loop: start=0, step=1, limit=8
  $region62: #{lenet5_forward.1} parent=0 // loop_pre_header
    _
  $region63: #{lenet5_forward.1} parent=0 // loop_header
    %s76 = sphi 0, %s80
    %p77 = scmp.ge.s32.totalorder %s76, 8
  $region64: #{lenet5_forward.1} parent=0 // loop_header_branch
    %79 = sbr.rel (%p77) target = $region68
  $region65: #{lenet5_forward.1} parent=0 // loop_body
    %s81 = smul.u32 %s76, 32
    %s82 = scalar_lea.vmem %s0, %s81
    %v83 = vld [vmem:[%s82] sm:$0xff]
    %v84 = vld [vmem:[%s82 + $0x8] sm:$0xff]
    %v85 = vld [vmem:[%s82 + $0x10] sm:$0xff]
    %v86 = vld [vmem:[%s82 + $0x18] sm:$0xff]
    %v87 = vpack.c.bf16 %v84, %v83
    %v88 = vpack.c.bf16 %v86, %v85
    %v89 = vld [vmem:[%s1] sm:$0xff]
    %v90 = vld [vmem:[%s1 + $0x8] sm:$0xff]
    %v91 = vld [vmem:[%s1 + $0x10] sm:$0xff]
    %v92 = vld [vmem:[%s1 + $0x18] sm:$0xff]
    %v97 = vunpack.c.l.b16 %v89
    %v98 = vunpack.c.h.b16 %v89
    %v99 = vunpack.c.l.b16 %v90
    %v100 = vunpack.c.h.b16 %v90
    %v101 = vunpack.c.l.b16 %v91
    %v102 = vunpack.c.h.b16 %v91
    %v103 = vunpack.c.l.b16 %v92
    %v104 = vunpack.c.h.b16 %v92
    %v105 = vpack.c.b16 %v99, %v97
    %v106 = vpack.c.b16 %v100, %v98
    %v107 = vpack.c.b16 %v103, %v101
    %v108 = vpack.c.b16 %v104, %v102
    %vm113 = vcmask 261120
    %v115 = vsel %vm113, %v87, 0
    %v118 = vsel %vm113, %v88, 0
    %120 = vmatprep.subr.bf16.mxu0 %v106
    %121 = vmatpush1.bf16.msra.mxu0 %v105
    %122 = vmatprep.subr.bf16.mxu0 %v108
    %123 = vmatpush1.bf16.msra.mxu0 %v107
    %124 = vmatprep.subr.bf16.mxu0 0
    %125 = vmatpush1.bf16.msra.mxu0 0
    %126 = vmatprep.subr.bf16.mxu0 0
    %127 = vmatpush1.bf16.msra.mxu0 0
    %128 = vmatprep.subr.bf16.mxu0 0
    %129 = vmatpush1.bf16.msra.mxu0 0
    %130 = vmatprep.subr.bf16.mxu0 0
    %131 = vmatpush1.bf16.msra.mxu0 0
    %132 = vmatprep.subr.bf16.mxu0 0
    %133 = vmatpush1.bf16.msra.mxu0 0
    %134 = vmatprep.subr.bf16.mxu0 0
    %135 = vmatpush1.bf16.msra.mxu0 0
    %136 = vmatprep.subr.bf16.mxu0 0
    %137 = vmatpush1.bf16.msra.mxu0 0
    %138 = vmatprep.subr.bf16.mxu0 0
    %139 = vmatpush1.bf16.msra.mxu0 0
    %140 = vmatprep.subr.bf16.mxu0 0
    %141 = vmatpush1.bf16.msra.mxu0 0
    %142 = vmatprep.subr.bf16.mxu0 0
    %143 = vmatpush1.bf16.msra.mxu0 0
    %144 = vmatprep.subr.bf16.mxu0 0
    %145 = vmatpush1.bf16.msra.mxu0 0
    %146 = vmatprep.subr.bf16.mxu0 0
    %147 = vmatpush1.bf16.msra.mxu0 0
    %148 = vmatprep.subr.bf16.mxu0 0
    %149 = vmatpush1.bf16.msra.mxu0 0
    %150 = vmatprep.subr.bf16.mxu0 0
    %151 = vmatpush1.bf16.msra.mxu0 0
    %152 = vmatprep.mubr.bf16.mxu0 0
    %153 = vmatmul.mubr.bf16.gmra.mrb[0].mxu0 %v115
    %v154 = vpop.f32.mrb[0].mxu0
    %v155 = vadd.f32 0.0, %v154
    %v156 = vpop.f32.mrb[0].mxu0
    %v157 = vadd.f32 0.0, %v156
    %v158 = vpop.f32.mrb[0].mxu0
    %v159 = vadd.f32 0.0, %v158
    %v160 = vpop.f32.mrb[0].mxu0
    %v161 = vadd.f32 0.0, %v160
    %162 = vmatprep.mubr.bf16.mxu0 0
    %163 = vmatmul.mubr.bf16.gmra.mrb[0].mxu0 %v118
    %v164 = vpop.f32.mrb[0].mxu0
    %v165 = vadd.f32 0.0, %v164
    %v166 = vpop.f32.mrb[0].mxu0
    %v167 = vadd.f32 0.0, %v166
    %v168 = vpop.f32.mrb[0].mxu0
    %v169 = vadd.f32 0.0, %v168
    %v170 = vpop.f32.mrb[0].mxu0
    %v171 = vadd.f32 0.0, %v170
    %172 = vdwg.mxu0
    %v173 = vadd.f32 %v56, %v155
    %v174 = vadd.f32 %v60, %v157
    %v175 = vadd.f32 %v56, %v159
    %v176 = vadd.f32 %v60, %v161
    %v177 = vadd.f32 %v56, %v165
    %v178 = vadd.f32 %v60, %v167
    %v179 = vadd.f32 %v56, %v169
    %v180 = vadd.f32 %v60, %v171
    %s181 = scalar_lea.vmem %s1, 32
    %v182 = vld [vmem:[%s181] sm:$0xff]
    %v183 = vld [vmem:[%s181 + $0x8] sm:$0xff]
    %v184 = vld [vmem:[%s181 + $0x10] sm:$0xff]
    %v185 = vld [vmem:[%s181 + $0x18] sm:$0xff]
    %vm186 = vsmask.f32 7424
    %v187 = vshrl.u32 %v87, 16
    %v189 = vshll.u32 %v87, 16
    %v191 = vrot.slane %v189, 1
    %v192 = vor.u32 %v187, %v191
    %v193 = vshll.u32 %v88, 16
    %v195 = vrot.slane %v193, 1
    %v196 = vsel %vm186, %v192, %v195
    %v197 = vshrl.u32 %v88, 16
    %v199 = vor.u32 %v197, %v195
    %v204 = vunpack.c.l.b16 %v182
    %v205 = vunpack.c.h.b16 %v182
    %v206 = vunpack.c.l.b16 %v183
    %v207 = vunpack.c.h.b16 %v183
    %v208 = vunpack.c.l.b16 %v184
    %v209 = vunpack.c.h.b16 %v184
    %v210 = vunpack.c.l.b16 %v185
    %v211 = vunpack.c.h.b16 %v185
    %v212 = vpack.c.b16 %v206, %v204
    %v213 = vpack.c.b16 %v207, %v205
    %v214 = vpack.c.b16 %v210, %v208
    %v215 = vpack.c.b16 %v211, %v209
    %v221 = vsel %vm113, %v196, 0
    %v224 = vsel %vm113, %v199, 0
    %226 = vmatprep.subr.bf16.mxu0 %v213
    %227 = vmatpush1.bf16.msra.mxu0 %v212
    %228 = vmatprep.subr.bf16.mxu0 %v215
    %229 = vmatpush1.bf16.msra.mxu0 %v214
    %230 = vmatprep.subr.bf16.mxu0 0
    %231 = vmatpush1.bf16.msra.mxu0 0
    %232 = vmatprep.subr.bf16.mxu0 0
    %233 = vmatpush1.bf16.msra.mxu0 0
    %234 = vmatprep.subr.bf16.mxu0 0
    %235 = vmatpush1.bf16.msra.mxu0 0
    %236 = vmatprep.subr.bf16.mxu0 0
    %237 = vmatpush1.bf16.msra.mxu0 0
    %238 = vmatprep.subr.bf16.mxu0 0
    %239 = vmatpush1.bf16.msra.mxu0 0
    %240 = vmatprep.subr.bf16.mxu0 0
    %241 = vmatpush1.bf16.msra.mxu0 0
    %242 = vmatprep.subr.bf16.mxu0 0
    %243 = vmatpush1.bf16.msra.mxu0 0
    %244 = vmatprep.subr.bf16.mxu0 0
    %245 = vmatpush1.bf16.msra.mxu0 0
    %246 = vmatprep.subr.bf16.mxu0 0
    %247 = vmatpush1.bf16.msra.mxu0 0
    %248 = vmatprep.subr.bf16.mxu0 0
    %249 = vmatpush1.bf16.msra.mxu0 0
    %250 = vmatprep.subr.bf16.mxu0 0
    %251 = vmatpush1.bf16.msra.mxu0 0
    %252 = vmatprep.subr.bf16.mxu0 0
    %253 = vmatpush1.bf16.msra.mxu0 0
    %254 = vmatprep.subr.bf16.mxu0 0
    %255 = vmatpush1.bf16.msra.mxu0 0
    %256 = vmatprep.subr.bf16.mxu0 0
    %257 = vmatpush1.bf16.msra.mxu0 0
    %258 = vmatprep.mubr.bf16.mxu0 0
    %259 = vmatmul.mubr.bf16.gmra.mrb[0].mxu0 %v221
    %v260 = vpop.f32.mrb[0].mxu0
    %v261 = vadd.f32 0.0, %v260
    %v262 = vpop.f32.mrb[0].mxu0
    %v263 = vadd.f32 0.0, %v262
    %v264 = vpop.f32.mrb[0].mxu0
    %v265 = vadd.f32 0.0, %v264
    %v266 = vpop.f32.mrb[0].mxu0
    %v267 = vadd.f32 0.0, %v266
    %268 = vmatprep.mubr.bf16.mxu0 0
    %269 = vmatmul.mubr.bf16.gmra.mrb[0].mxu0 %v224
    %v270 = vpop.f32.mrb[0].mxu0
    %v271 = vadd.f32 0.0, %v270
    %v272 = vpop.f32.mrb[0].mxu0
    %v273 = vadd.f32 0.0, %v272
    %v274 = vpop.f32.mrb[0].mxu0
    %v275 = vadd.f32 0.0, %v274
    %v276 = vpop.f32.mrb[0].mxu0
    %v277 = vadd.f32 0.0, %v276
    %278 = vdwg.mxu0
    %v279 = vadd.f32 %v173, %v261
    %v280 = vadd.f32 %v174, %v263
    %v281 = vadd.f32 %v175, %v265
    %v282 = vadd.f32 %v176, %v267
    %v283 = vadd.f32 %v177, %v271
    %v284 = vadd.f32 %v178, %v273
    %v285 = vadd.f32 %v179, %v275
    %v286 = vadd.f32 %v180, %v277
    %s287 = scalar_lea.vmem %s1, 64
    %v288 = vld [vmem:[%s287] sm:$0xff]
    %v289 = vld [vmem:[%s287 + $0x8] sm:$0xff]
    %v290 = vld [vmem:[%s287 + $0x10] sm:$0xff]
    %v291 = vld [vmem:[%s287 + $0x18] sm:$0xff]
    %vm294 = vcmask 1046528
    %v295 = vrot.slane %v87, 1
    %v296 = vrot.slane %v88, 1
    %v297 = vsel %vm294, %v295, %v296
    %v302 = vunpack.c.l.b16 %v288
    %v303 = vunpack.c.h.b16 %v288
    %v304 = vunpack.c.l.b16 %v289
    %v305 = vunpack.c.h.b16 %v289
    %v306 = vunpack.c.l.b16 %v290
    %v307 = vunpack.c.h.b16 %v290
    %v308 = vunpack.c.l.b16 %v291
    %v309 = vunpack.c.h.b16 %v291
    %v310 = vpack.c.b16 %v304, %v302
    %v311 = vpack.c.b16 %v305, %v303
    %v312 = vpack.c.b16 %v308, %v306
    %v313 = vpack.c.b16 %v309, %v307
    %v319 = vsel %vm113, %v297, 0
    %v322 = vsel %vm113, %v296, 0
    %324 = vmatprep.subr.bf16.mxu0 %v311
    %325 = vmatpush1.bf16.msra.mxu0 %v310
    %326 = vmatprep.subr.bf16.mxu0 %v313
    %327 = vmatpush1.bf16.msra.mxu0 %v312
    %328 = vmatprep.subr.bf16.mxu0 0
    %329 = vmatpush1.bf16.msra.mxu0 0
    %330 = vmatprep.subr.bf16.mxu0 0
    %331 = vmatpush1.bf16.msra.mxu0 0
    %332 = vmatprep.subr.bf16.mxu0 0
    %333 = vmatpush1.bf16.msra.mxu0 0
    %334 = vmatprep.subr.bf16.mxu0 0
    %335 = vmatpush1.bf16.msra.mxu0 0
    %336 = vmatprep.subr.bf16.mxu0 0
    %337 = vmatpush1.bf16.msra.mxu0 0
    %338 = vmatprep.subr.bf16.mxu0 0
    %339 = vmatpush1.bf16.msra.mxu0 0
    %340 = vmatprep.subr.bf16.mxu0 0
    %341 = vmatpush1.bf16.msra.mxu0 0
    %342 = vmatprep.subr.bf16.mxu0 0
    %343 = vmatpush1.bf16.msra.mxu0 0
    %344 = vmatprep.subr.bf16.mxu0 0
    %345 = vmatpush1.bf16.msra.mxu0 0
    %346 = vmatprep.subr.bf16.mxu0 0
    %347 = vmatpush1.bf16.msra.mxu0 0
    %348 = vmatprep.subr.bf16.mxu0 0
    %349 = vmatpush1.bf16.msra.mxu0 0
    %350 = vmatprep.subr.bf16.mxu0 0
    %351 = vmatpush1.bf16.msra.mxu0 0
    %352 = vmatprep.subr.bf16.mxu0 0
    %353 = vmatpush1.bf16.msra.mxu0 0
    %354 = vmatprep.subr.bf16.mxu0 0
    %355 = vmatpush1.bf16.msra.mxu0 0
    %356 = vmatprep.mubr.bf16.mxu0 0
    %357 = vmatmul.mubr.bf16.gmra.mrb[0].mxu0 %v319
    %v358 = vpop.f32.mrb[0].mxu0
    %v359 = vadd.f32 0.0, %v358
    %v360 = vpop.f32.mrb[0].mxu0
    %v361 = vadd.f32 0.0, %v360
    %v362 = vpop.f32.mrb[0].mxu0
    %v363 = vadd.f32 0.0, %v362
    %v364 = vpop.f32.mrb[0].mxu0
    %v365 = vadd.f32 0.0, %v364
    %366 = vmatprep.mubr.bf16.mxu0 0
    %367 = vmatmul.mubr.bf16.gmra.mrb[0].mxu0 %v322
    %v368 = vpop.f32.mrb[0].mxu0
    %v369 = vadd.f32 0.0, %v368
    %v370 = vpop.f32.mrb[0].mxu0
    %v371 = vadd.f32 0.0, %v370
    %v372 = vpop.f32.mrb[0].mxu0
    %v373 = vadd.f32 0.0, %v372
    %v374 = vpop.f32.mrb[0].mxu0
    %v375 = vadd.f32 0.0, %v374
    %376 = vdwg.mxu0
    %v377 = vadd.f32 %v279, %v359
    %v378 = vadd.f32 %v280, %v361
    %v379 = vadd.f32 %v281, %v363
    %v380 = vadd.f32 %v282, %v365
    %v381 = vadd.f32 %v283, %v369
    %v382 = vadd.f32 %v284, %v371
    %v383 = vadd.f32 %v285, %v373
    %v384 = vadd.f32 %v286, %v375
    %s385 = scalar_lea.vmem %s1, 96
    %v386 = vld [vmem:[%s385] sm:$0xff]
    %v387 = vld [vmem:[%s385 + $0x8] sm:$0xff]
    %v388 = vld [vmem:[%s385 + $0x10] sm:$0xff]
    %v389 = vld [vmem:[%s385 + $0x18] sm:$0xff]
    %vm390 = vsmask.f32 6400
    %v391 = vrot.slane %v187, 1
    %v392 = vrot.slane %v189, 2
    %v393 = vor.u32 %v391, %v392
    %v394 = vrot.slane %v197, 1
    %v395 = vrot.slane %v193, 2
    %v396 = vor.u32 %v394, %v395
    %v397 = vsel %vm390, %v393, %v396
    %v402 = vunpack.c.l.b16 %v386
    %v403 = vunpack.c.h.b16 %v386
    %v404 = vunpack.c.l.b16 %v387
    %v405 = vunpack.c.h.b16 %v387
    %v406 = vunpack.c.l.b16 %v388
    %v407 = vunpack.c.h.b16 %v388
    %v408 = vunpack.c.l.b16 %v389
    %v409 = vunpack.c.h.b16 %v389
    %v410 = vpack.c.b16 %v404, %v402
    %v411 = vpack.c.b16 %v405, %v403
    %v412 = vpack.c.b16 %v408, %v406
    %v413 = vpack.c.b16 %v409, %v407
    %v419 = vsel %vm113, %v397, 0
    %v422 = vsel %vm113, %v396, 0
    %424 = vmatprep.subr.bf16.mxu0 %v411
    %425 = vmatpush1.bf16.msra.mxu0 %v410
    %426 = vmatprep.subr.bf16.mxu0 %v413
    %427 = vmatpush1.bf16.msra.mxu0 %v412
    %428 = vmatprep.subr.bf16.mxu0 0
    %429 = vmatpush1.bf16.msra.mxu0 0
    %430 = vmatprep.subr.bf16.mxu0 0
    %431 = vmatpush1.bf16.msra.mxu0 0
    %432 = vmatprep.subr.bf16.mxu0 0
    %433 = vmatpush1.bf16.msra.mxu0 0
    %434 = vmatprep.subr.bf16.mxu0 0
    %435 = vmatpush1.bf16.msra.mxu0 0
    %436 = vmatprep.subr.bf16.mxu0 0
    %437 = vmatpush1.bf16.msra.mxu0 0
    %438 = vmatprep.subr.bf16.mxu0 0
    %439 = vmatpush1.bf16.msra.mxu0 0
    %440 = vmatprep.subr.bf16.mxu0 0
    %441 = vmatpush1.bf16.msra.mxu0 0
    %442 = vmatprep.subr.bf16.mxu0 0
    %443 = vmatpush1.bf16.msra.mxu0 0
    %444 = vmatprep.subr.bf16.mxu0 0
    %445 = vmatpush1.bf16.msra.mxu0 0
    %446 = vmatprep.subr.bf16.mxu0 0
    %447 = vmatpush1.bf16.msra.mxu0 0
    %448 = vmatprep.subr.bf16.mxu0 0
    %449 = vmatpush1.bf16.msra.mxu0 0
    %450 = vmatprep.subr.bf16.mxu0 0
    %451 = vmatpush1.bf16.msra.mxu0 0
    %452 = vmatprep.subr.bf16.mxu0 0
    %453 = vmatpush1.bf16.msra.mxu0 0
    %454 = vmatprep.subr.bf16.mxu0 0
    %455 = vmatpush1.bf16.msra.mxu0 0
    %456 = vmatprep.mubr.bf16.mxu0 0
    %457 = vmatmul.mubr.bf16.gmra.mrb[0].mxu0 %v419
    %v458 = vpop.f32.mrb[0].mxu0
    %v459 = vadd.f32 0.0, %v458
    %v460 = vpop.f32.mrb[0].mxu0
    %v461 = vadd.f32 0.0, %v460
    %v462 = vpop.f32.mrb[0].mxu0
    %v463 = vadd.f32 0.0, %v462
    %v464 = vpop.f32.mrb[0].mxu0
    %v465 = vadd.f32 0.0, %v464
    %466 = vmatprep.mubr.bf16.mxu0 0
    %467 = vmatmul.mubr.bf16.gmra.mrb[0].mxu0 %v422
    %v468 = vpop.f32.mrb[0].mxu0
    %v469 = vadd.f32 0.0, %v468
    %v470 = vpop.f32.mrb[0].mxu0
    %v471 = vadd.f32 0.0, %v470
    %v472 = vpop.f32.mrb[0].mxu0
    %v473 = vadd.f32 0.0, %v472
    %v474 = vpop.f32.mrb[0].mxu0
    %v475 = vadd.f32 0.0, %v474
    %476 = vdwg.mxu0
    %v477 = vadd.f32 %v377, %v459
    %v478 = vadd.f32 %v378, %v461
    %v479 = vadd.f32 %v379, %v463
    %v480 = vadd.f32 %v380, %v465
    %v481 = vadd.f32 %v381, %v469
    %v482 = vadd.f32 %v382, %v471
    %v483 = vadd.f32 %v383, %v473
    %v484 = vadd.f32 %v384, %v475
    %s485 = scalar_lea.vmem %s1, 128
    %v486 = vld [vmem:[%s485] sm:$0xff]
    %v487 = vld [vmem:[%s485 + $0x8] sm:$0xff]
    %v488 = vld [vmem:[%s485 + $0x10] sm:$0xff]
    %v489 = vld [vmem:[%s485 + $0x18] sm:$0xff]
    %vm490 = vcmask 1045504
    %v491 = vrot.slane %v87, 2
    %v492 = vrot.slane %v88, 2
    %v493 = vsel %vm490, %v491, %v492
    %v498 = vunpack.c.l.b16 %v486
    %v499 = vunpack.c.h.b16 %v486
    %v500 = vunpack.c.l.b16 %v487
    %v501 = vunpack.c.h.b16 %v487
    %v502 = vunpack.c.l.b16 %v488
    %v503 = vunpack.c.h.b16 %v488
    %v504 = vunpack.c.l.b16 %v489
    %v505 = vunpack.c.h.b16 %v489
    %v506 = vpack.c.b16 %v500, %v498
    %v507 = vpack.c.b16 %v501, %v499
    %v508 = vpack.c.b16 %v504, %v502
    %v509 = vpack.c.b16 %v505, %v503
    %v515 = vsel %vm113, %v493, 0
    %v518 = vsel %vm113, %v492, 0
    %520 = vmatprep.subr.bf16.mxu0 %v507
    %521 = vmatpush1.bf16.msra.mxu0 %v506
    %522 = vmatprep.subr.bf16.mxu0 %v509
    %523 = vmatpush1.bf16.msra.mxu0 %v508
    %524 = vmatprep.subr.bf16.mxu0 0
    %525 = vmatpush1.bf16.msra.mxu0 0
    %526 = vmatprep.subr.bf16.mxu0 0
    %527 = vmatpush1.bf16.msra.mxu0 0
    %528 = vmatprep.subr.bf16.mxu0 0
    %529 = vmatpush1.bf16.msra.mxu0 0
    %530 = vmatprep.subr.bf16.mxu0 0
    %531 = vmatpush1.bf16.msra.mxu0 0
    %532 = vmatprep.subr.bf16.mxu0 0
    %533 = vmatpush1.bf16.msra.mxu0 0
    %534 = vmatprep.subr.bf16.mxu0 0
    %535 = vmatpush1.bf16.msra.mxu0 0
    %536 = vmatprep.subr.bf16.mxu0 0
    %537 = vmatpush1.bf16.msra.mxu0 0
    %538 = vmatprep.subr.bf16.mxu0 0
    %539 = vmatpush1.bf16.msra.mxu0 0
    %540 = vmatprep.subr.bf16.mxu0 0
    %541 = vmatpush1.bf16.msra.mxu0 0
    %542 = vmatprep.subr.bf16.mxu0 0
    %543 = vmatpush1.bf16.msra.mxu0 0
    %544 = vmatprep.subr.bf16.mxu0 0
    %545 = vmatpush1.bf16.msra.mxu0 0
    %546 = vmatprep.subr.bf16.mxu0 0
    %547 = vmatpush1.bf16.msra.mxu0 0
    %548 = vmatprep.subr.bf16.mxu0 0
    %549 = vmatpush1.bf16.msra.mxu0 0
    %550 = vmatprep.subr.bf16.mxu0 0
    %551 = vmatpush1.bf16.msra.mxu0 0
    %552 = vmatprep.mubr.bf16.mxu0 0
    %553 = vmatmul.mubr.bf16.gmra.mrb[0].mxu0 %v515
    %v554 = vpop.f32.mrb[0].mxu0
    %v555 = vadd.f32 0.0, %v554
    %v556 = vpop.f32.mrb[0].mxu0
    %v557 = vadd.f32 0.0, %v556
    %v558 = vpop.f32.mrb[0].mxu0
    %v559 = vadd.f32 0.0, %v558
    %v560 = vpop.f32.mrb[0].mxu0
    %v561 = vadd.f32 0.0, %v560
    %562 = vmatprep.mubr.bf16.mxu0 0
    %563 = vmatmul.mubr.bf16.gmra.mrb[0].mxu0 %v518
    %v564 = vpop.f32.mrb[0].mxu0
    %v565 = vadd.f32 0.0, %v564
    %v566 = vpop.f32.mrb[0].mxu0
    %v567 = vadd.f32 0.0, %v566
    %v568 = vpop.f32.mrb[0].mxu0
    %v569 = vadd.f32 0.0, %v568
    %v570 = vpop.f32.mrb[0].mxu0
    %v571 = vadd.f32 0.0, %v570
    %572 = vdwg.mxu0
    %v573 = vadd.f32 %v477, %v555
    %v574 = vadd.f32 %v478, %v557
    %v575 = vadd.f32 %v479, %v559
    %v576 = vadd.f32 %v480, %v561
    %v577 = vadd.f32 %v481, %v565
    %v578 = vadd.f32 %v482, %v567
    %v579 = vadd.f32 %v483, %v569
    %v580 = vadd.f32 %v484, %v571
    %v581 = vtanh.pop %v573
    %v582 = vtanh.pop %v574
    %v583 = vtanh.pop %v575
    %v584 = vtanh.pop %v576
    %v585 = vtanh.pop %v577
    %v586 = vtanh.pop %v578
    %v587 = vtanh.pop %v579
    %v588 = vtanh.pop %v580
    %v589 = vld [vmem:[%s3] sm:$0xf]
    %v590 = vld [vmem:[%s3 + $0x4] sm:$0x7]
    %v591 = vpack.c.bf16 %v583, %v581
    %v592 = vpack.c.bf16 %v584, %v582
    %v593 = vpack.c.bf16 %v587, %v585
    %v594 = vpack.c.bf16 %v588, %v586
    %v597 = vunpack.c.l.b16 %v589
    %v598 = vunpack.c.l.b16 %v590
    %v599 = vpack.c.b16 %v598, %v597
    %vm600 = vcmask 228352
    %v602 = vsel %vm600, %v599, 0
    %vm604 = vcmask 1045504
    %v606 = vsel %vm604, %v593, 0
    %v609 = vsel %vm604, %v594, 0
    %611 = vmatprep.subr.bf16.mxu0 %v592
    %612 = vmatpush1.bf16.msra.mxu0 %v591
    %613 = vmatprep.subr.bf16.mxu0 %v609
    %614 = vmatpush1.bf16.msra.mxu0 %v606
    %615 = vmatprep.subr.bf16.mxu0 0
    %616 = vmatpush1.bf16.msra.mxu0 0
    %617 = vmatprep.subr.bf16.mxu0 0
    %618 = vmatpush1.bf16.msra.mxu0 0
    %619 = vmatprep.subr.bf16.mxu0 0
    %620 = vmatpush1.bf16.msra.mxu0 0
    %621 = vmatprep.subr.bf16.mxu0 0
    %622 = vmatpush1.bf16.msra.mxu0 0
    %623 = vmatprep.subr.bf16.mxu0 0
    %624 = vmatpush1.bf16.msra.mxu0 0
    %625 = vmatprep.subr.bf16.mxu0 0
    %626 = vmatpush1.bf16.msra.mxu0 0
    %627 = vmatprep.subr.bf16.mxu0 0
    %628 = vmatpush1.bf16.msra.mxu0 0
    %629 = vmatprep.subr.bf16.mxu0 0
    %630 = vmatpush1.bf16.msra.mxu0 0
    %631 = vmatprep.subr.bf16.mxu0 0
    %632 = vmatpush1.bf16.msra.mxu0 0
    %633 = vmatprep.subr.bf16.mxu0 0
    %634 = vmatpush1.bf16.msra.mxu0 0
    %635 = vmatprep.subr.bf16.mxu0 0
    %636 = vmatpush1.bf16.msra.mxu0 0
    %637 = vmatprep.subr.bf16.mxu0 0
    %638 = vmatpush1.bf16.msra.mxu0 0
    %639 = vmatprep.subr.bf16.mxu0 0
    %640 = vmatpush1.bf16.msra.mxu0 0
    %641 = vmatprep.subr.bf16.mxu0 0
    %642 = vmatpush1.bf16.msra.mxu0 0
    %643 = vmatprep.mubr.bf16.mxu0 0
    %644 = vmatmul.mubr.bf16.gmra.mrb[0].mxu0 %v602
    %v645 = vpop.f32.mrb[0].mxu0
    %v646 = vadd.f32 0.0, %v645
    %v647 = vpop.f32.mrb[0].mxu0
    %v648 = vadd.f32 0.0, %v647
    %v649 = vpop.f32.mrb[0].mxu0
    %v650 = vadd.f32 0.0, %v649
    %v651 = vpop.f32.mrb[0].mxu0
    %v652 = vadd.f32 0.0, %v651
    %653 = vdwg.mxu0
    %v654 = vpack.c.bf16 %v650, %v646
    %v655 = vpack.c.bf16 %v652, %v648
    %v656 = vld [vmem:[%s4] sm:$0xf]
    %v657 = vld [vmem:[%s4 + $0x4] sm:$0xf]
    %v658 = vld [vmem:[%s4 + $0x8] sm:$0xf]
    %v659 = vld [vmem:[%s4 + $0xc] sm:$0xf]
    %v660 = vld [vmem:[%s4 + $0x10] sm:$0xf]
    %v661 = vld [vmem:[%s4 + $0x14] sm:$0xf]
    %v662 = vld [vmem:[%s4 + $0x18] sm:$0xf]
    %v663 = vld [vmem:[%s4 + $0x1c] sm:$0xf]
    %v664 = vld [vmem:[%s4 + $0x20] sm:$0xf]
    %v665 = vld [vmem:[%s4 + $0x24] sm:$0xf]
    %v666 = vld [vmem:[%s4 + $0x28] sm:$0xf]
    %v667 = vld [vmem:[%s4 + $0x2c] sm:$0xf]
    %v668 = vld [vmem:[%s4 + $0x30] sm:$0xf]
    %v669 = vld [vmem:[%s4 + $0x34] sm:$0xf]
    %v670 = vld [vmem:[%s4 + $0x38] sm:$0xf]
    %v671 = vld [vmem:[%s4 + $0x3c] sm:$0xf]
    %v672 = vld [vmem:[%s4 + $0x40] sm:$0xf]
    %v673 = vld [vmem:[%s4 + $0x44] sm:$0xf]
    %v674 = vld [vmem:[%s4 + $0x48] sm:$0xf]
    %v675 = vld [vmem:[%s4 + $0x4c] sm:$0xf]
    %v676 = vld [vmem:[%s4 + $0x50] sm:$0xf]
    %v698 = vunpack.c.l.b16 %v656
    %v699 = vunpack.c.l.b16 %v657
    %v700 = vunpack.c.l.b16 %v658
    %v701 = vunpack.c.l.b16 %v659
    %v702 = vunpack.c.l.b16 %v660
    %v703 = vunpack.c.l.b16 %v661
    %v704 = vunpack.c.l.b16 %v662
    %v705 = vunpack.c.l.b16 %v663
    %v706 = vunpack.c.l.b16 %v664
    %v707 = vunpack.c.l.b16 %v665
    %v708 = vunpack.c.l.b16 %v666
    %v709 = vunpack.c.l.b16 %v667
    %v710 = vunpack.c.l.b16 %v668
    %v711 = vunpack.c.l.b16 %v669
    %v712 = vunpack.c.l.b16 %v670
    %v713 = vunpack.c.l.b16 %v671
    %v714 = vunpack.c.l.b16 %v672
    %v715 = vunpack.c.l.b16 %v673
    %v716 = vunpack.c.l.b16 %v674
    %v717 = vunpack.c.l.b16 %v675
    %v718 = vunpack.c.l.b16 %v676
    %v719 = vpack.c.b16 %v699, %v698
    %v720 = vpack.c.b16 %v701, %v700
    %v721 = vpack.c.b16 %v703, %v702
    %v722 = vpack.c.b16 %v705, %v704
    %v723 = vpack.c.b16 %v707, %v706
    %v724 = vpack.c.b16 %v709, %v708
    %v725 = vpack.c.b16 %v711, %v710
    %v726 = vpack.c.b16 %v713, %v712
    %v727 = vpack.c.b16 %v715, %v714
    %v728 = vpack.c.b16 %v717, %v716
    %v729 = vpack.c.b16 %v718, %v718
    %vm740 = vcmask 326656
    %v742 = vsel %vm740, %v655, 0
    %vm744 = vcmask 1043456
    %v746 = vsel %vm744, %v729, 0
    %748 = vmatprep.subr.bf16.mxu0 0
    %749 = vmatpush1.bf16.msra.mxu0 %v719
    %750 = vmatprep.subr.bf16.mxu0 0
    %751 = vmatpush1.bf16.msra.mxu0 %v720
    %752 = vmatprep.subr.bf16.mxu0 0
    %753 = vmatpush1.bf16.msra.mxu0 %v721
    %754 = vmatprep.subr.bf16.mxu0 0
    %755 = vmatpush1.bf16.msra.mxu0 %v722
    %756 = vmatprep.subr.bf16.mxu0 0
    %757 = vmatpush1.bf16.msra.mxu0 %v723
    %758 = vmatprep.subr.bf16.mxu0 0
    %759 = vmatpush1.bf16.msra.mxu0 %v724
    %760 = vmatprep.subr.bf16.mxu0 0
    %761 = vmatpush1.bf16.msra.mxu0 %v725
    %762 = vmatprep.subr.bf16.mxu0 0
    %763 = vmatpush1.bf16.msra.mxu0 %v726
    %764 = vmatprep.subr.bf16.mxu0 0
    %765 = vmatpush1.bf16.msra.mxu0 %v727
    %766 = vmatprep.subr.bf16.mxu0 0
    %767 = vmatpush1.bf16.msra.mxu0 %v728
    %768 = vmatprep.subr.bf16.mxu0 0
    %769 = vmatpush1.bf16.msra.mxu0 %v746
    %770 = vmatprep.subr.bf16.mxu0 0
    %771 = vmatpush1.bf16.msra.mxu0 0
    %772 = vmatprep.subr.bf16.mxu0 0
    %773 = vmatpush1.bf16.msra.mxu0 0
    %774 = vmatprep.subr.bf16.mxu0 0
    %775 = vmatpush1.bf16.msra.mxu0 0
    %776 = vmatprep.subr.bf16.mxu0 0
    %777 = vmatpush1.bf16.msra.mxu0 0
    %778 = vmatprep.subr.bf16.mxu0 0
    %779 = vmatpush1.bf16.msra.mxu0 0
    %780 = vmatprep.mubr.bf16.mxu0 %v742
    %781 = vmatmul.mubr.bf16.gmra.mrb[0].mxu0 %v654
    %v782 = vpop.f32.mrb[0].mxu0
    %v783 = vadd.f32 0.0, %v782
    %v784 = vpop.f32.mrb[0].mxu0
    %v785 = vpop.f32.mrb[0].mxu0
    %v786 = vadd.f32 0.0, %v785
    %v787 = vpop.f32.mrb[0].mxu0
    %788 = vdwg.mxu0
    %v789 = vpack.c.bf16 %v786, %v783
    %v790 = vld [vmem:[%s5] sm:$0xff]
    %v791 = vld [vmem:[%s5 + $0x8] sm:$0xff]
    %v792 = vld [vmem:[%s5 + $0x10] sm:$0xff]
    %v793 = vld [vmem:[%s5 + $0x18] sm:$0xff]
    %v794 = vld [vmem:[%s5 + $0x20] sm:$0xff]
    %v795 = vld [vmem:[%s5 + $0x28] sm:$0xff]
    %v796 = vld [vmem:[%s5 + $0x30] sm:$0xff]
    %v797 = vld [vmem:[%s5 + $0x38] sm:$0xff]
    %v798 = vld [vmem:[%s5 + $0x40] sm:$0xff]
    %v799 = vld [vmem:[%s5 + $0x48] sm:$0xff]
    %v800 = vld [vmem:[%s5 + $0x50] sm:$0x33]
    %v812 = vunpack.c.l.b16 %v790
    %v813 = vunpack.c.h.b16 %v790
    %v814 = vunpack.c.l.b16 %v791
    %v815 = vunpack.c.h.b16 %v791
    %v816 = vunpack.c.l.b16 %v792
    %v817 = vunpack.c.h.b16 %v792
    %v818 = vunpack.c.l.b16 %v793
    %v819 = vunpack.c.h.b16 %v793
    %v820 = vunpack.c.l.b16 %v794
    %v821 = vunpack.c.h.b16 %v794
    %v822 = vunpack.c.l.b16 %v795
    %v823 = vunpack.c.h.b16 %v795
    %v824 = vunpack.c.l.b16 %v796
    %v825 = vunpack.c.h.b16 %v796
    %v826 = vunpack.c.l.b16 %v797
    %v827 = vunpack.c.h.b16 %v797
    %v828 = vunpack.c.l.b16 %v798
    %v829 = vunpack.c.h.b16 %v798
    %v830 = vunpack.c.l.b16 %v799
    %v831 = vunpack.c.h.b16 %v799
    %v832 = vunpack.c.l.b16 %v800
    %v833 = vunpack.c.h.b16 %v800
    %v834 = vpack.c.b16 %v814, %v812
    %v835 = vpack.c.b16 %v815, %v813
    %v836 = vpack.c.b16 %v818, %v816
    %v837 = vpack.c.b16 %v819, %v817
    %v838 = vpack.c.b16 %v822, %v820
    %v839 = vpack.c.b16 %v823, %v821
    %v840 = vpack.c.b16 %v826, %v824
    %v841 = vpack.c.b16 %v827, %v825
    %v842 = vpack.c.b16 %v830, %v828
    %v843 = vpack.c.b16 %v831, %v829
    %v844 = vpack.c.b16 %v832, %v832
    %v845 = vpack.c.b16 %v833, %v833
    %vm856 = vcmask 687104
    %v858 = vsel %vm856, %v789, 0
    %vm860 = vcmask 1041408
    %v862 = vsel %vm860, %v844, 0
    %v865 = vsel %vm860, %v845, 0
    %867 = vmatprep.subr.bf16.mxu0 %v835
    %868 = vmatpush1.bf16.msra.mxu0 %v834
    %869 = vmatprep.subr.bf16.mxu0 %v837
    %870 = vmatpush1.bf16.msra.mxu0 %v836
    %871 = vmatprep.subr.bf16.mxu0 %v839
    %872 = vmatpush1.bf16.msra.mxu0 %v838
    %873 = vmatprep.subr.bf16.mxu0 %v841
    %874 = vmatpush1.bf16.msra.mxu0 %v840
    %875 = vmatprep.subr.bf16.mxu0 %v843
    %876 = vmatpush1.bf16.msra.mxu0 %v842
    %877 = vmatprep.subr.bf16.mxu0 %v865
    %878 = vmatpush1.bf16.msra.mxu0 %v862
    %879 = vmatprep.subr.bf16.mxu0 0
    %880 = vmatpush1.bf16.msra.mxu0 0
    %881 = vmatprep.subr.bf16.mxu0 0
    %882 = vmatpush1.bf16.msra.mxu0 0
    %883 = vmatprep.subr.bf16.mxu0 0
    %884 = vmatpush1.bf16.msra.mxu0 0
    %885 = vmatprep.subr.bf16.mxu0 0
    %886 = vmatpush1.bf16.msra.mxu0 0
    %887 = vmatprep.subr.bf16.mxu0 0
    %888 = vmatpush1.bf16.msra.mxu0 0
    %889 = vmatprep.subr.bf16.mxu0 0
    %890 = vmatpush1.bf16.msra.mxu0 0
    %891 = vmatprep.subr.bf16.mxu0 0
    %892 = vmatpush1.bf16.msra.mxu0 0
    %893 = vmatprep.subr.bf16.mxu0 0
    %894 = vmatpush1.bf16.msra.mxu0 0
    %895 = vmatprep.subr.bf16.mxu0 0
    %896 = vmatpush1.bf16.msra.mxu0 0
    %897 = vmatprep.subr.bf16.mxu0 0
    %898 = vmatpush1.bf16.msra.mxu0 0
    %899 = vmatprep.mubr.bf16.mxu0 0
    %900 = vmatmul.mubr.bf16.gmra.mrb[0].mxu0 %v858
    %v901 = vpop.f32.mrb[0].mxu0
    %v902 = vadd.f32 0.0, %v901
    %v903 = vpop.f32.mrb[0].mxu0
    %v904 = vadd.f32 0.0, %v903
    %v905 = vpop.f32.mrb[0].mxu0
    %v906 = vadd.f32 0.0, %v905
    %v907 = vpop.f32.mrb[0].mxu0
    %v908 = vadd.f32 0.0, %v907
    %909 = vdwg.mxu0
    %v910 = vadd.f32 %v68, %v902
    %v911 = vadd.f32 %v72, %v904
    %v912 = vadd.f32 %v68, %v906
    %v913 = vadd.f32 %v72, %v908
    %s914 = scalar_lea.vmem %s5, 88
    %v915 = vld [vmem:[%s914] sm:$0xff]
    %v916 = vld [vmem:[%s914 + $0x8] sm:$0xff]
    %v917 = vld [vmem:[%s914 + $0x10] sm:$0xff]
    %v918 = vld [vmem:[%s914 + $0x18] sm:$0xff]
    %v919 = vld [vmem:[%s914 + $0x20] sm:$0xff]
    %v920 = vld [vmem:[%s914 + $0x28] sm:$0xff]
    %v921 = vld [vmem:[%s914 + $0x30] sm:$0xff]
    %v922 = vld [vmem:[%s914 + $0x38] sm:$0xff]
    %v923 = vld [vmem:[%s914 + $0x40] sm:$0xff]
    %v924 = vld [vmem:[%s914 + $0x48] sm:$0xff]
    %v925 = vld [vmem:[%s914 + $0x50] sm:$0x33]
    %v926 = vshrl.u32 %v789, 16
    %v928 = vshll.u32 %v789, 16
    %v930 = vrot.slane %v928, 1
    %v931 = vor.u32 %v926, %v930
    %v943 = vunpack.c.l.b16 %v915
    %v944 = vunpack.c.h.b16 %v915
    %v945 = vunpack.c.l.b16 %v916
    %v946 = vunpack.c.h.b16 %v916
    %v947 = vunpack.c.l.b16 %v917
    %v948 = vunpack.c.h.b16 %v917
    %v949 = vunpack.c.l.b16 %v918
    %v950 = vunpack.c.h.b16 %v918
    %v951 = vunpack.c.l.b16 %v919
    %v952 = vunpack.c.h.b16 %v919
    %v953 = vunpack.c.l.b16 %v920
    %v954 = vunpack.c.h.b16 %v920
    %v955 = vunpack.c.l.b16 %v921
    %v956 = vunpack.c.h.b16 %v921
    %v957 = vunpack.c.l.b16 %v922
    %v958 = vunpack.c.h.b16 %v922
    %v959 = vunpack.c.l.b16 %v923
    %v960 = vunpack.c.h.b16 %v923
    %v961 = vunpack.c.l.b16 %v924
    %v962 = vunpack.c.h.b16 %v924
    %v963 = vunpack.c.l.b16 %v925
    %v964 = vunpack.c.h.b16 %v925
    %v965 = vpack.c.b16 %v945, %v943
    %v966 = vpack.c.b16 %v946, %v944
    %v967 = vpack.c.b16 %v949, %v947
    %v968 = vpack.c.b16 %v950, %v948
    %v969 = vpack.c.b16 %v953, %v951
    %v970 = vpack.c.b16 %v954, %v952
    %v971 = vpack.c.b16 %v957, %v955
    %v972 = vpack.c.b16 %v958, %v956
    %v973 = vpack.c.b16 %v961, %v959
    %v974 = vpack.c.b16 %v962, %v960
    %v975 = vpack.c.b16 %v963, %v963
    %v976 = vpack.c.b16 %v964, %v964
    %v988 = vsel %vm856, %v931, 0
    %v991 = vsel %vm860, %v975, 0
    %v994 = vsel %vm860, %v976, 0
    %996 = vmatprep.subr.bf16.mxu0 %v966
    %997 = vmatpush1.bf16.msra.mxu0 %v965
    %998 = vmatprep.subr.bf16.mxu0 %v968
    %999 = vmatpush1.bf16.msra.mxu0 %v967
    %1000 = vmatprep.subr.bf16.mxu0 %v970
    %1001 = vmatpush1.bf16.msra.mxu0 %v969
    %1002 = vmatprep.subr.bf16.mxu0 %v972
    %1003 = vmatpush1.bf16.msra.mxu0 %v971
    %1004 = vmatprep.subr.bf16.mxu0 %v974
    %1005 = vmatpush1.bf16.msra.mxu0 %v973
    %1006 = vmatprep.subr.bf16.mxu0 %v994
    %1007 = vmatpush1.bf16.msra.mxu0 %v991
    %1008 = vmatprep.subr.bf16.mxu0 0
    %1009 = vmatpush1.bf16.msra.mxu0 0
    %1010 = vmatprep.subr.bf16.mxu0 0
    %1011 = vmatpush1.bf16.msra.mxu0 0
    %1012 = vmatprep.subr.bf16.mxu0 0
    %1013 = vmatpush1.bf16.msra.mxu0 0
    %1014 = vmatprep.subr.bf16.mxu0 0
    %1015 = vmatpush1.bf16.msra.mxu0 0
    %1016 = vmatprep.subr.bf16.mxu0 0
    %1017 = vmatpush1.bf16.msra.mxu0 0
    %1018 = vmatprep.subr.bf16.mxu0 0
    %1019 = vmatpush1.bf16.msra.mxu0 0
    %1020 = vmatprep.subr.bf16.mxu0 0
    %1021 = vmatpush1.bf16.msra.mxu0 0
    %1022 = vmatprep.subr.bf16.mxu0 0
    %1023 = vmatpush1.bf16.msra.mxu0 0
    %1024 = vmatprep.subr.bf16.mxu0 0
    %1025 = vmatpush1.bf16.msra.mxu0 0
    %1026 = vmatprep.subr.bf16.mxu0 0
    %1027 = vmatpush1.bf16.msra.mxu0 0
    %1028 = vmatprep.mubr.bf16.mxu0 0
    %1029 = vmatmul.mubr.bf16.gmra.mrb[0].mxu0 %v988
    %v1030 = vpop.f32.mrb[0].mxu0
    %v1031 = vadd.f32 0.0, %v1030
    %v1032 = vpop.f32.mrb[0].mxu0
    %v1033 = vadd.f32 0.0, %v1032
    %v1034 = vpop.f32.mrb[0].mxu0
    %v1035 = vadd.f32 0.0, %v1034
    %v1036 = vpop.f32.mrb[0].mxu0
    %v1037 = vadd.f32 0.0, %v1036
    %1038 = vdwg.mxu0
    %v1039 = vadd.f32 %v910, %v1031
    %v1040 = vadd.f32 %v911, %v1033
    %v1041 = vadd.f32 %v912, %v1035
    %v1042 = vadd.f32 %v913, %v1037
    %s1043 = scalar_lea.vmem %s5, 176
    %v1044 = vld [vmem:[%s1043] sm:$0xff]
    %v1045 = vld [vmem:[%s1043 + $0x8] sm:$0xff]
    %v1046 = vld [vmem:[%s1043 + $0x10] sm:$0xff]
    %v1047 = vld [vmem:[%s1043 + $0x18] sm:$0xff]
    %v1048 = vld [vmem:[%s1043 + $0x20] sm:$0xff]
    %v1049 = vld [vmem:[%s1043 + $0x28] sm:$0xff]
    %v1050 = vld [vmem:[%s1043 + $0x30] sm:$0xff]
    %v1051 = vld [vmem:[%s1043 + $0x38] sm:$0xff]
    %v1052 = vld [vmem:[%s1043 + $0x40] sm:$0xff]
    %v1053 = vld [vmem:[%s1043 + $0x48] sm:$0xff]
    %v1054 = vld [vmem:[%s1043 + $0x50] sm:$0x33]
    %v1056 = vrot.slane %v789, 1
    %v1068 = vunpack.c.l.b16 %v1044
    %v1069 = vunpack.c.h.b16 %v1044
    %v1070 = vunpack.c.l.b16 %v1045
    %v1071 = vunpack.c.h.b16 %v1045
    %v1072 = vunpack.c.l.b16 %v1046
    %v1073 = vunpack.c.h.b16 %v1046
    %v1074 = vunpack.c.l.b16 %v1047
    %v1075 = vunpack.c.h.b16 %v1047
    %v1076 = vunpack.c.l.b16 %v1048
    %v1077 = vunpack.c.h.b16 %v1048
    %v1078 = vunpack.c.l.b16 %v1049
    %v1079 = vunpack.c.h.b16 %v1049
    %v1080 = vunpack.c.l.b16 %v1050
    %v1081 = vunpack.c.h.b16 %v1050
    %v1082 = vunpack.c.l.b16 %v1051
    %v1083 = vunpack.c.h.b16 %v1051
    %v1084 = vunpack.c.l.b16 %v1052
    %v1085 = vunpack.c.h.b16 %v1052
    %v1086 = vunpack.c.l.b16 %v1053
    %v1087 = vunpack.c.h.b16 %v1053
    %v1088 = vunpack.c.l.b16 %v1054
    %v1089 = vunpack.c.h.b16 %v1054
    %v1090 = vpack.c.b16 %v1070, %v1068
    %v1091 = vpack.c.b16 %v1071, %v1069
    %v1092 = vpack.c.b16 %v1074, %v1072
    %v1093 = vpack.c.b16 %v1075, %v1073
    %v1094 = vpack.c.b16 %v1078, %v1076
    %v1095 = vpack.c.b16 %v1079, %v1077
    %v1096 = vpack.c.b16 %v1082, %v1080
    %v1097 = vpack.c.b16 %v1083, %v1081
    %v1098 = vpack.c.b16 %v1086, %v1084
    %v1099 = vpack.c.b16 %v1087, %v1085
    %v1100 = vpack.c.b16 %v1088, %v1088
    %v1101 = vpack.c.b16 %v1089, %v1089
    %v1113 = vsel %vm856, %v1056, 0
    %v1116 = vsel %vm860, %v1100, 0
    %v1119 = vsel %vm860, %v1101, 0
    %1121 = vmatprep.subr.bf16.mxu0 %v1091
    %1122 = vmatpush1.bf16.msra.mxu0 %v1090
    %1123 = vmatprep.subr.bf16.mxu0 %v1093
    %1124 = vmatpush1.bf16.msra.mxu0 %v1092
    %1125 = vmatprep.subr.bf16.mxu0 %v1095
    %1126 = vmatpush1.bf16.msra.mxu0 %v1094
    %1127 = vmatprep.subr.bf16.mxu0 %v1097
    %1128 = vmatpush1.bf16.msra.mxu0 %v1096
    %1129 = vmatprep.subr.bf16.mxu0 %v1099
    %1130 = vmatpush1.bf16.msra.mxu0 %v1098
    %1131 = vmatprep.subr.bf16.mxu0 %v1119
    %1132 = vmatpush1.bf16.msra.mxu0 %v1116
    %1133 = vmatprep.subr.bf16.mxu0 0
    %1134 = vmatpush1.bf16.msra.mxu0 0
    %1135 = vmatprep.subr.bf16.mxu0 0
    %1136 = vmatpush1.bf16.msra.mxu0 0
    %1137 = vmatprep.subr.bf16.mxu0 0
    %1138 = vmatpush1.bf16.msra.mxu0 0
    %1139 = vmatprep.subr.bf16.mxu0 0
    %1140 = vmatpush1.bf16.msra.mxu0 0
    %1141 = vmatprep.subr.bf16.mxu0 0
    %1142 = vmatpush1.bf16.msra.mxu0 0
    %1143 = vmatprep.subr.bf16.mxu0 0
    %1144 = vmatpush1.bf16.msra.mxu0 0
    %1145 = vmatprep.subr.bf16.mxu0 0
    %1146 = vmatpush1.bf16.msra.mxu0 0
    %1147 = vmatprep.subr.bf16.mxu0 0
    %1148 = vmatpush1.bf16.msra.mxu0 0
    %1149 = vmatprep.subr.bf16.mxu0 0
    %1150 = vmatpush1.bf16.msra.mxu0 0
    %1151 = vmatprep.subr.bf16.mxu0 0
    %1152 = vmatpush1.bf16.msra.mxu0 0
    %1153 = vmatprep.mubr.bf16.mxu0 0
    %1154 = vmatmul.mubr.bf16.gmra.mrb[0].mxu0 %v1113
    %v1155 = vpop.f32.mrb[0].mxu0
    %v1156 = vadd.f32 0.0, %v1155
    %v1157 = vpop.f32.mrb[0].mxu0
    %v1158 = vadd.f32 0.0, %v1157
    %v1159 = vpop.f32.mrb[0].mxu0
    %v1160 = vadd.f32 0.0, %v1159
    %v1161 = vpop.f32.mrb[0].mxu0
    %v1162 = vadd.f32 0.0, %v1161
    %1163 = vdwg.mxu0
    %v1164 = vadd.f32 %v1039, %v1156
    %v1165 = vadd.f32 %v1040, %v1158
    %v1166 = vadd.f32 %v1041, %v1160
    %v1167 = vadd.f32 %v1042, %v1162
    %s1168 = scalar_lea.vmem %s5, 264
    %v1169 = vld [vmem:[%s1168] sm:$0xff]
    %v1170 = vld [vmem:[%s1168 + $0x8] sm:$0xff]
    %v1171 = vld [vmem:[%s1168 + $0x10] sm:$0xff]
    %v1172 = vld [vmem:[%s1168 + $0x18] sm:$0xff]
    %v1173 = vld [vmem:[%s1168 + $0x20] sm:$0xff]
    %v1174 = vld [vmem:[%s1168 + $0x28] sm:$0xff]
    %v1175 = vld [vmem:[%s1168 + $0x30] sm:$0xff]
    %v1176 = vld [vmem:[%s1168 + $0x38] sm:$0xff]
    %v1177 = vld [vmem:[%s1168 + $0x40] sm:$0xff]
    %v1178 = vld [vmem:[%s1168 + $0x48] sm:$0xff]
    %v1179 = vld [vmem:[%s1168 + $0x50] sm:$0x33]
    %v1180 = vrot.slane %v926, 1
    %v1181 = vrot.slane %v928, 2
    %v1182 = vor.u32 %v1180, %v1181
    %v1194 = vunpack.c.l.b16 %v1169
    %v1195 = vunpack.c.h.b16 %v1169
    %v1196 = vunpack.c.l.b16 %v1170
    %v1197 = vunpack.c.h.b16 %v1170
    %v1198 = vunpack.c.l.b16 %v1171
    %v1199 = vunpack.c.h.b16 %v1171
    %v1200 = vunpack.c.l.b16 %v1172
    %v1201 = vunpack.c.h.b16 %v1172
    %v1202 = vunpack.c.l.b16 %v1173
    %v1203 = vunpack.c.h.b16 %v1173
    %v1204 = vunpack.c.l.b16 %v1174
    %v1205 = vunpack.c.h.b16 %v1174
    %v1206 = vunpack.c.l.b16 %v1175
    %v1207 = vunpack.c.h.b16 %v1175
    %v1208 = vunpack.c.l.b16 %v1176
    %v1209 = vunpack.c.h.b16 %v1176
    %v1210 = vunpack.c.l.b16 %v1177
    %v1211 = vunpack.c.h.b16 %v1177
    %v1212 = vunpack.c.l.b16 %v1178
    %v1213 = vunpack.c.h.b16 %v1178
    %v1214 = vunpack.c.l.b16 %v1179
    %v1215 = vunpack.c.h.b16 %v1179
    %v1216 = vpack.c.b16 %v1196, %v1194
    %v1217 = vpack.c.b16 %v1197, %v1195
    %v1218 = vpack.c.b16 %v1200, %v1198
    %v1219 = vpack.c.b16 %v1201, %v1199
    %v1220 = vpack.c.b16 %v1204, %v1202
    %v1221 = vpack.c.b16 %v1205, %v1203
    %v1222 = vpack.c.b16 %v1208, %v1206
    %v1223 = vpack.c.b16 %v1209, %v1207
    %v1224 = vpack.c.b16 %v1212, %v1210
    %v1225 = vpack.c.b16 %v1213, %v1211
    %v1226 = vpack.c.b16 %v1214, %v1214
    %v1227 = vpack.c.b16 %v1215, %v1215
    %v1239 = vsel %vm856, %v1182, 0
    %v1242 = vsel %vm860, %v1226, 0
    %v1245 = vsel %vm860, %v1227, 0
    %1247 = vmatprep.subr.bf16.mxu0 %v1217
    %1248 = vmatpush1.bf16.msra.mxu0 %v1216
    %1249 = vmatprep.subr.bf16.mxu0 %v1219
    %1250 = vmatpush1.bf16.msra.mxu0 %v1218
    %1251 = vmatprep.subr.bf16.mxu0 %v1221
    %1252 = vmatpush1.bf16.msra.mxu0 %v1220
    %1253 = vmatprep.subr.bf16.mxu0 %v1223
    %1254 = vmatpush1.bf16.msra.mxu0 %v1222
    %1255 = vmatprep.subr.bf16.mxu0 %v1225
    %1256 = vmatpush1.bf16.msra.mxu0 %v1224
    %1257 = vmatprep.subr.bf16.mxu0 %v1245
    %1258 = vmatpush1.bf16.msra.mxu0 %v1242
    %1259 = vmatprep.subr.bf16.mxu0 0
    %1260 = vmatpush1.bf16.msra.mxu0 0
    %1261 = vmatprep.subr.bf16.mxu0 0
    %1262 = vmatpush1.bf16.msra.mxu0 0
    %1263 = vmatprep.subr.bf16.mxu0 0
    %1264 = vmatpush1.bf16.msra.mxu0 0
    %1265 = vmatprep.subr.bf16.mxu0 0
    %1266 = vmatpush1.bf16.msra.mxu0 0
    %1267 = vmatprep.subr.bf16.mxu0 0
    %1268 = vmatpush1.bf16.msra.mxu0 0
    %1269 = vmatprep.subr.bf16.mxu0 0
    %1270 = vmatpush1.bf16.msra.mxu0 0
    %1271 = vmatprep.subr.bf16.mxu0 0
    %1272 = vmatpush1.bf16.msra.mxu0 0
    %1273 = vmatprep.subr.bf16.mxu0 0
    %1274 = vmatpush1.bf16.msra.mxu0 0
    %1275 = vmatprep.subr.bf16.mxu0 0
    %1276 = vmatpush1.bf16.msra.mxu0 0
    %1277 = vmatprep.subr.bf16.mxu0 0
    %1278 = vmatpush1.bf16.msra.mxu0 0
    %1279 = vmatprep.mubr.bf16.mxu0 0
    %1280 = vmatmul.mubr.bf16.gmra.mrb[0].mxu0 %v1239
    %v1281 = vpop.f32.mrb[0].mxu0
    %v1282 = vadd.f32 0.0, %v1281
    %v1283 = vpop.f32.mrb[0].mxu0
    %v1284 = vadd.f32 0.0, %v1283
    %v1285 = vpop.f32.mrb[0].mxu0
    %v1286 = vadd.f32 0.0, %v1285
    %v1287 = vpop.f32.mrb[0].mxu0
    %v1288 = vadd.f32 0.0, %v1287
    %1289 = vdwg.mxu0
    %v1290 = vadd.f32 %v1164, %v1282
    %v1291 = vadd.f32 %v1165, %v1284
    %v1292 = vadd.f32 %v1166, %v1286
    %v1293 = vadd.f32 %v1167, %v1288
    %s1294 = scalar_lea.vmem %s5, 352
    %v1295 = vld [vmem:[%s1294] sm:$0xff]
    %v1296 = vld [vmem:[%s1294 + $0x8] sm:$0xff]
    %v1297 = vld [vmem:[%s1294 + $0x10] sm:$0xff]
    %v1298 = vld [vmem:[%s1294 + $0x18] sm:$0xff]
    %v1299 = vld [vmem:[%s1294 + $0x20] sm:$0xff]
    %v1300 = vld [vmem:[%s1294 + $0x28] sm:$0xff]
    %v1301 = vld [vmem:[%s1294 + $0x30] sm:$0xff]
    %v1302 = vld [vmem:[%s1294 + $0x38] sm:$0xff]
    %v1303 = vld [vmem:[%s1294 + $0x40] sm:$0xff]
    %v1304 = vld [vmem:[%s1294 + $0x48] sm:$0xff]
    %v1305 = vld [vmem:[%s1294 + $0x50] sm:$0x33]
    %v1306 = vrot.slane %v789, 2
    %v1318 = vunpack.c.l.b16 %v1295
    %v1319 = vunpack.c.h.b16 %v1295
    %v1320 = vunpack.c.l.b16 %v1296
    %v1321 = vunpack.c.h.b16 %v1296
    %v1322 = vunpack.c.l.b16 %v1297
    %v1323 = vunpack.c.h.b16 %v1297
    %v1324 = vunpack.c.l.b16 %v1298
    %v1325 = vunpack.c.h.b16 %v1298
    %v1326 = vunpack.c.l.b16 %v1299
    %v1327 = vunpack.c.h.b16 %v1299
    %v1328 = vunpack.c.l.b16 %v1300
    %v1329 = vunpack.c.h.b16 %v1300
    %v1330 = vunpack.c.l.b16 %v1301
    %v1331 = vunpack.c.h.b16 %v1301
    %v1332 = vunpack.c.l.b16 %v1302
    %v1333 = vunpack.c.h.b16 %v1302
    %v1334 = vunpack.c.l.b16 %v1303
    %v1335 = vunpack.c.h.b16 %v1303
    %v1336 = vunpack.c.l.b16 %v1304
    %v1337 = vunpack.c.h.b16 %v1304
    %v1338 = vunpack.c.l.b16 %v1305
    %v1339 = vunpack.c.h.b16 %v1305
    %v1340 = vpack.c.b16 %v1320, %v1318
    %v1341 = vpack.c.b16 %v1321, %v1319
    %v1342 = vpack.c.b16 %v1324, %v1322
    %v1343 = vpack.c.b16 %v1325, %v1323
    %v1344 = vpack.c.b16 %v1328, %v1326
    %v1345 = vpack.c.b16 %v1329, %v1327
    %v1346 = vpack.c.b16 %v1332, %v1330
    %v1347 = vpack.c.b16 %v1333, %v1331
    %v1348 = vpack.c.b16 %v1336, %v1334
    %v1349 = vpack.c.b16 %v1337, %v1335
    %v1350 = vpack.c.b16 %v1338, %v1338
    %v1351 = vpack.c.b16 %v1339, %v1339
    %v1363 = vsel %vm856, %v1306, 0
    %v1366 = vsel %vm860, %v1350, 0
    %v1369 = vsel %vm860, %v1351, 0
    %1371 = vmatprep.subr.bf16.mxu0 %v1341
    %1372 = vmatpush1.bf16.msra.mxu0 %v1340
    %1373 = vmatprep.subr.bf16.mxu0 %v1343
    %1374 = vmatpush1.bf16.msra.mxu0 %v1342
    %1375 = vmatprep.subr.bf16.mxu0 %v1345
    %1376 = vmatpush1.bf16.msra.mxu0 %v1344
    %1377 = vmatprep.subr.bf16.mxu0 %v1347
    %1378 = vmatpush1.bf16.msra.mxu0 %v1346
    %1379 = vmatprep.subr.bf16.mxu0 %v1349
    %1380 = vmatpush1.bf16.msra.mxu0 %v1348
    %1381 = vmatprep.subr.bf16.mxu0 %v1369
    %1382 = vmatpush1.bf16.msra.mxu0 %v1366
    %1383 = vmatprep.subr.bf16.mxu0 0
    %1384 = vmatpush1.bf16.msra.mxu0 0
    %1385 = vmatprep.subr.bf16.mxu0 0
    %1386 = vmatpush1.bf16.msra.mxu0 0
    %1387 = vmatprep.subr.bf16.mxu0 0
    %1388 = vmatpush1.bf16.msra.mxu0 0
    %1389 = vmatprep.subr.bf16.mxu0 0
    %1390 = vmatpush1.bf16.msra.mxu0 0
    %1391 = vmatprep.subr.bf16.mxu0 0
    %1392 = vmatpush1.bf16.msra.mxu0 0
    %1393 = vmatprep.subr.bf16.mxu0 0
    %1394 = vmatpush1.bf16.msra.mxu0 0
    %1395 = vmatprep.subr.bf16.mxu0 0
    %1396 = vmatpush1.bf16.msra.mxu0 0
    %1397 = vmatprep.subr.bf16.mxu0 0
    %1398 = vmatpush1.bf16.msra.mxu0 0
    %1399 = vmatprep.subr.bf16.mxu0 0
    %1400 = vmatpush1.bf16.msra.mxu0 0
    %1401 = vmatprep.subr.bf16.mxu0 0
    %1402 = vmatpush1.bf16.msra.mxu0 0
    %1403 = vmatprep.mubr.bf16.mxu0 0
    %1404 = vmatmul.mubr.bf16.gmra.mrb[0].mxu0 %v1363
    %v1405 = vpop.f32.mrb[0].mxu0
    %v1406 = vadd.f32 0.0, %v1405
    %v1407 = vpop.f32.mrb[0].mxu0
    %v1408 = vadd.f32 0.0, %v1407
    %v1409 = vpop.f32.mrb[0].mxu0
    %v1410 = vadd.f32 0.0, %v1409
    %v1411 = vpop.f32.mrb[0].mxu0
    %v1412 = vadd.f32 0.0, %v1411
    %1413 = vdwg.mxu0
    %v1414 = vadd.f32 %v1290, %v1406
    %v1415 = vadd.f32 %v1291, %v1408
    %v1416 = vadd.f32 %v1292, %v1410
    %v1417 = vadd.f32 %v1293, %v1412
    %v1418 = vtanh.pop %v1414
    %v1419 = vtanh.pop %v1415
    %v1420 = vtanh.pop %v1416
    %v1421 = vtanh.pop %v1417
    %v1422 = vld [vmem:[%s7] sm:$0x7]
    %v1423 = vpack.c.bf16 %v1420, %v1418
    %v1424 = vpack.c.bf16 %v1421, %v1419
    %vm1425 = vcmask 80896
    %v1427 = vsel %vm1425, %v1422, 0
    %vm1429 = vcmask 1044480
    %v1431 = vsel %vm1429, %v1423, 0
    %v1434 = vsel %vm1429, %v1424, 0
    %1436 = vmatprep.subr.bf16.mxu0 %v1434
    %1437 = vmatpush1.bf16.msra.mxu0 %v1431
    %1438 = vmatprep.subr.bf16.mxu0 0
    %1439 = vmatpush1.bf16.msra.mxu0 0
    %1440 = vmatprep.subr.bf16.mxu0 0
    %1441 = vmatpush1.bf16.msra.mxu0 0
    %1442 = vmatprep.subr.bf16.mxu0 0
    %1443 = vmatpush1.bf16.msra.mxu0 0
    %1444 = vmatprep.subr.bf16.mxu0 0
    %1445 = vmatpush1.bf16.msra.mxu0 0
    %1446 = vmatprep.subr.bf16.mxu0 0
    %1447 = vmatpush1.bf16.msra.mxu0 0
    %1448 = vmatprep.subr.bf16.mxu0 0
    %1449 = vmatpush1.bf16.msra.mxu0 0
    %1450 = vmatprep.subr.bf16.mxu0 0
    %1451 = vmatpush1.bf16.msra.mxu0 0
    %1452 = vmatprep.subr.bf16.mxu0 0
    %1453 = vmatpush1.bf16.msra.mxu0 0
    %1454 = vmatprep.subr.bf16.mxu0 0
    %1455 = vmatpush1.bf16.msra.mxu0 0
    %1456 = vmatprep.subr.bf16.mxu0 0
    %1457 = vmatpush1.bf16.msra.mxu0 0
    %1458 = vmatprep.subr.bf16.mxu0 0
    %1459 = vmatpush1.bf16.msra.mxu0 0
    %1460 = vmatprep.subr.bf16.mxu0 0
    %1461 = vmatpush1.bf16.msra.mxu0 0
    %1462 = vmatprep.subr.bf16.mxu0 0
    %1463 = vmatpush1.bf16.msra.mxu0 0
    %1464 = vmatprep.subr.bf16.mxu0 0
    %1465 = vmatpush1.bf16.msra.mxu0 0
    %1466 = vmatprep.subr.bf16.mxu0 0
    %1467 = vmatpush1.bf16.msra.mxu0 0
    %1468 = vmatprep.mubr.bf16.mxu0 0
    %1469 = vmatmul.mubr.bf16.gmra.mrb[0].mxu0 %v1427
    %v1470 = vpop.f32.mrb[0].mxu0
    %v1471 = vadd.f32 0.0, %v1470
    %v1472 = vpop.f32.mrb[0].mxu0
    %v1473 = vadd.f32 0.0, %v1472
    %v1474 = vpop.f32.mrb[0].mxu0
    %v1475 = vpop.f32.mrb[0].mxu0
    %1476 = vdwg.mxu0
    %v1477 = vpack.c.bf16 %v1471, %v1471
    %v1478 = vpack.c.bf16 %v1473, %v1473
    %v1479 = vld [vmem:[%s8] sm:$0xf]
    %v1480 = vld [vmem:[%s8 + $0x4] sm:$0xf]
    %v1481 = vld [vmem:[%s8 + $0x8] sm:$0xf]
    %v1482 = vld [vmem:[%s8 + $0xc] sm:$0xf]
    %v1483 = vld [vmem:[%s8 + $0x10] sm:$0xf]
    %v1484 = vld [vmem:[%s8 + $0x14] sm:$0xf]
    %v1485 = vld [vmem:[%s8 + $0x18] sm:$0xf]
    %v1486 = vld [vmem:[%s8 + $0x1c] sm:$0xf]
    %v1487 = vld [vmem:[%s8 + $0x20] sm:$0xf]
    %v1488 = vld [vmem:[%s8 + $0x24] sm:$0xf]
    %v1489 = vld [vmem:[%s8 + $0x28] sm:$0xf]
    %v1490 = vld [vmem:[%s8 + $0x2c] sm:$0xf]
    %v1491 = vld [vmem:[%s8 + $0x30] sm:$0xf]
    %v1492 = vld [vmem:[%s8 + $0x34] sm:$0xf]
    %v1493 = vld [vmem:[%s8 + $0x38] sm:$0xf]
    %v1494 = vld [vmem:[%s8 + $0x3c] sm:$0xf]
    %v1495 = vld [vmem:[%s8 + $0x40] sm:$0xf]
    %v1496 = vld [vmem:[%s8 + $0x44] sm:$0xf]
    %v1497 = vld [vmem:[%s8 + $0x48] sm:$0xf]
    %v1498 = vld [vmem:[%s8 + $0x4c] sm:$0xf]
    %v1519 = vunpack.c.l.b16 %v1479
    %v1520 = vunpack.c.l.b16 %v1480
    %v1521 = vunpack.c.l.b16 %v1481
    %v1522 = vunpack.c.l.b16 %v1482
    %v1523 = vunpack.c.l.b16 %v1483
    %v1524 = vunpack.c.l.b16 %v1484
    %v1525 = vunpack.c.l.b16 %v1485
    %v1526 = vunpack.c.l.b16 %v1486
    %v1527 = vunpack.c.l.b16 %v1487
    %v1528 = vunpack.c.l.b16 %v1488
    %v1529 = vunpack.c.l.b16 %v1489
    %v1530 = vunpack.c.l.b16 %v1490
    %v1531 = vunpack.c.l.b16 %v1491
    %v1532 = vunpack.c.l.b16 %v1492
    %v1533 = vunpack.c.l.b16 %v1493
    %v1534 = vunpack.c.l.b16 %v1494
    %v1535 = vunpack.c.l.b16 %v1495
    %v1536 = vunpack.c.l.b16 %v1496
    %v1537 = vunpack.c.l.b16 %v1497
    %v1538 = vunpack.c.l.b16 %v1498
    %v1539 = vpack.c.b16 %v1520, %v1519
    %v1540 = vpack.c.b16 %v1522, %v1521
    %v1541 = vpack.c.b16 %v1524, %v1523
    %v1542 = vpack.c.b16 %v1526, %v1525
    %v1543 = vpack.c.b16 %v1528, %v1527
    %v1544 = vpack.c.b16 %v1530, %v1529
    %v1545 = vpack.c.b16 %v1532, %v1531
    %v1546 = vpack.c.b16 %v1534, %v1533
    %v1547 = vpack.c.b16 %v1536, %v1535
    %v1548 = vpack.c.b16 %v1538, %v1537
    %v1560 = vsel %vm113, %v1478, 0
    %1562 = vmatprep.subr.bf16.mxu0 0
    %1563 = vmatpush1.bf16.msra.mxu0 %v1539
    %1564 = vmatprep.subr.bf16.mxu0 0
    %1565 = vmatpush1.bf16.msra.mxu0 %v1540
    %1566 = vmatprep.subr.bf16.mxu0 0
    %1567 = vmatpush1.bf16.msra.mxu0 %v1541
    %1568 = vmatprep.subr.bf16.mxu0 0
    %1569 = vmatpush1.bf16.msra.mxu0 %v1542
    %1570 = vmatprep.subr.bf16.mxu0 0
    %1571 = vmatpush1.bf16.msra.mxu0 %v1543
    %1572 = vmatprep.subr.bf16.mxu0 0
    %1573 = vmatpush1.bf16.msra.mxu0 %v1544
    %1574 = vmatprep.subr.bf16.mxu0 0
    %1575 = vmatpush1.bf16.msra.mxu0 %v1545
    %1576 = vmatprep.subr.bf16.mxu0 0
    %1577 = vmatpush1.bf16.msra.mxu0 %v1546
    %1578 = vmatprep.subr.bf16.mxu0 0
    %1579 = vmatpush1.bf16.msra.mxu0 %v1547
    %1580 = vmatprep.subr.bf16.mxu0 0
    %1581 = vmatpush1.bf16.msra.mxu0 %v1548
    %1582 = vmatprep.subr.bf16.mxu0 0
    %1583 = vmatpush1.bf16.msra.mxu0 0
    %1584 = vmatprep.subr.bf16.mxu0 0
    %1585 = vmatpush1.bf16.msra.mxu0 0
    %1586 = vmatprep.subr.bf16.mxu0 0
    %1587 = vmatpush1.bf16.msra.mxu0 0
    %1588 = vmatprep.subr.bf16.mxu0 0
    %1589 = vmatpush1.bf16.msra.mxu0 0
    %1590 = vmatprep.subr.bf16.mxu0 0
    %1591 = vmatpush1.bf16.msra.mxu0 0
    %1592 = vmatprep.subr.bf16.mxu0 0
    %1593 = vmatpush1.bf16.msra.mxu0 0
    %1594 = vmatprep.mubr.bf16.mxu0 %v1560
    %1595 = vmatmul.mubr.bf16.gmra.mrb[0].mxu0 %v1477
    %v1596 = vpop.f32.mrb[0].mxu0
    %v1597 = vadd.f32 0.0, %v1596
    %v1598 = vpop.f32.mrb[0].mxu0
    %v1599 = vpop.f32.mrb[0].mxu0
    %v1600 = vpop.f32.mrb[0].mxu0
    %1601 = vdwg.mxu0
    %s1602 = scalar_lea.vmem [#allocation2], %s76
    %vm1603 = vcmask 647168
    %1604 = vst.msk [vmem:[%s1602] sm:$0x1] %vm1603, %v1597
    %s1605 = sadd.s32 %s76, 8
    %s1606 = scalar_lea.vmem [#allocation2], %s1605
    %vm1607 = vcmask 648193
    %1608 = vst.msk [vmem:[%s1606 - $0x1] sm:$0x2] %vm1607, %v1597
    %s1609 = sadd.s32 %s76, 16
    %s1610 = scalar_lea.vmem [#allocation2], %s1609
    %vm1611 = vcmask 649218
    %1612 = vst.msk [vmem:[%s1610 - $0x2] sm:$0x4] %vm1611, %v1597
    %s1613 = sadd.s32 %s76, 24
    %s1614 = scalar_lea.vmem [#allocation2], %s1613
    %vm1615 = vcmask 650243
    %1616 = vst.msk [vmem:[%s1614 - $0x3] sm:$0x8] %vm1615, %v1597
    %s1617 = sadd.s32 %s76, 32
    %s1618 = scalar_lea.vmem [#allocation2], %s1617
    %vm1619 = vcmask 651268
    %1620 = vst.msk [vmem:[%s1618 - $0x4] sm:$0x10] %vm1619, %v1597
  $region66: #{lenet5_forward.1} parent=0 // loop_footer
    %s80 = sadd.s32 1, %s76
  $region67: #{lenet5_forward.1} parent=0 // loop_footer_branch
    %75 = sbr.rel target = $region63
  $region68: #{lenet5_forward.1} parent=0 // loop_exit
    _
  %v1621 = vld [vmem:[%s10] sm:$0x1]
  %v1623 = vlaneseq
  %v1624 = vshrl.u32 %v1623, 7
  %v1625 = vsub.s32 0, %v1624
  %v1626 = vrot.slane %v1621, %v1625
  %v1628 = vld [vmem:[#allocation2] sm:$0xff]
  %v1629 = vpack.c.bf16 %v1628, %v1628
  %v1630 = vld [vmem:[%s9] sm:$0xf]
  %v1631 = vld [vmem:[%s9 + $0x4] sm:$0xf]
  %v1632 = vld [vmem:[%s9 + $0x8] sm:$0xf]
  %v1633 = vld [vmem:[%s9 + $0xc] sm:$0xf]
  %v1634 = vld [vmem:[%s9 + $0x10] sm:$0xf]
  %v1635 = vld [vmem:[%s9 + $0x14] sm:$0xf]
  %v1636 = vld [vmem:[%s9 + $0x18] sm:$0xf]
  %v1637 = vld [vmem:[%s9 + $0x1c] sm:$0xf]
  %v1638 = vld [vmem:[%s9 + $0x20] sm:$0xf]
  %v1639 = vld [vmem:[%s9 + $0x24] sm:$0xf]
  %v1650 = vunpack.c.l.b16 %v1630
  %v1651 = vunpack.c.l.b16 %v1631
  %v1652 = vunpack.c.l.b16 %v1632
  %v1653 = vunpack.c.l.b16 %v1633
  %v1654 = vunpack.c.l.b16 %v1634
  %v1655 = vunpack.c.l.b16 %v1635
  %v1656 = vunpack.c.l.b16 %v1636
  %v1657 = vunpack.c.l.b16 %v1637
  %v1658 = vunpack.c.l.b16 %v1638
  %v1659 = vunpack.c.l.b16 %v1639
  %v1660 = vpack.c.b16 %v1651, %v1650
  %v1661 = vpack.c.b16 %v1653, %v1652
  %v1662 = vpack.c.b16 %v1655, %v1654
  %v1663 = vpack.c.b16 %v1657, %v1656
  %v1664 = vpack.c.b16 %v1659, %v1658
  %vm1670 = vcmask 654336
  %v1672 = vsel %vm1670, %v1629, 0
  %1674 = vmatprep.subr.bf16.mxu0 0
  %1675 = vmatpush1.bf16.msra.mxu0 %v1660
  %1676 = vmatprep.subr.bf16.mxu0 0
  %1677 = vmatpush1.bf16.msra.mxu0 %v1661
  %1678 = vmatprep.subr.bf16.mxu0 0
  %1679 = vmatpush1.bf16.msra.mxu0 %v1662
  %1680 = vmatprep.subr.bf16.mxu0 0
  %1681 = vmatpush1.bf16.msra.mxu0 %v1663
  %1682 = vmatprep.subr.bf16.mxu0 0
  %1683 = vmatpush1.bf16.msra.mxu0 %v1664
  %1684 = vmatprep.subr.bf16.mxu0 0
  %1685 = vmatpush1.bf16.msra.mxu0 0
  %1686 = vmatprep.subr.bf16.mxu0 0
  %1687 = vmatpush1.bf16.msra.mxu0 0
  %1688 = vmatprep.subr.bf16.mxu0 0
  %1689 = vmatpush1.bf16.msra.mxu0 0
  %1690 = vmatprep.subr.bf16.mxu0 0
  %1691 = vmatpush1.bf16.msra.mxu0 0
  %1692 = vmatprep.subr.bf16.mxu0 0
  %1693 = vmatpush1.bf16.msra.mxu0 0
  %1694 = vmatprep.subr.bf16.mxu0 0
  %1695 = vmatpush1.bf16.msra.mxu0 0
  %1696 = vmatprep.subr.bf16.mxu0 0
  %1697 = vmatpush1.bf16.msra.mxu0 0
  %1698 = vmatprep.subr.bf16.mxu0 0
  %1699 = vmatpush1.bf16.msra.mxu0 0
  %1700 = vmatprep.subr.bf16.mxu0 0
  %1701 = vmatpush1.bf16.msra.mxu0 0
  %1702 = vmatprep.subr.bf16.mxu0 0
  %1703 = vmatpush1.bf16.msra.mxu0 0
  %1704 = vmatprep.subr.bf16.mxu0 0
  %1705 = vmatpush1.bf16.msra.mxu0 0
  %1706 = vmatprep.mubr.bf16.mxu0 0
  %1707 = vmatmul.mubr.bf16.gmra.mrb[0].mxu0 %v1672
  %v1708 = vpop.f32.mrb[0].mxu0
  %v1709 = vadd.f32 0.0, %v1708
  %v1710 = vpop.f32.mrb[0].mxu0
  %v1711 = vpop.f32.mrb[0].mxu0
  %v1712 = vpop.f32.mrb[0].mxu0
  %1713 = vdwg.mxu0
  %v1714 = vadd.f32 %v1626, %v1709
  %s1715 = scalar_lea.vmem [#allocation2], 8
  %v1716 = vld [vmem:[%s1715] sm:$0xff]
  %v1717 = vpack.c.bf16 %v1716, %v1716
  %s1718 = scalar_lea.vmem %s9, 40
  %v1719 = vld [vmem:[%s1718] sm:$0xf]
  %v1720 = vld [vmem:[%s1718 + $0x4] sm:$0xf]
  %v1721 = vld [vmem:[%s1718 + $0x8] sm:$0xf]
  %v1722 = vld [vmem:[%s1718 + $0xc] sm:$0xf]
  %v1723 = vld [vmem:[%s1718 + $0x10] sm:$0xf]
  %v1724 = vld [vmem:[%s1718 + $0x14] sm:$0xf]
  %v1725 = vld [vmem:[%s1718 + $0x18] sm:$0xf]
  %v1726 = vld [vmem:[%s1718 + $0x1c] sm:$0xf]
  %v1727 = vld [vmem:[%s1718 + $0x20] sm:$0xf]
  %v1728 = vld [vmem:[%s1718 + $0x24] sm:$0xf]
  %v1739 = vunpack.c.l.b16 %v1719
  %v1740 = vunpack.c.l.b16 %v1720
  %v1741 = vunpack.c.l.b16 %v1721
  %v1742 = vunpack.c.l.b16 %v1722
  %v1743 = vunpack.c.l.b16 %v1723
  %v1744 = vunpack.c.l.b16 %v1724
  %v1745 = vunpack.c.l.b16 %v1725
  %v1746 = vunpack.c.l.b16 %v1726
  %v1747 = vunpack.c.l.b16 %v1727
  %v1748 = vunpack.c.l.b16 %v1728
  %v1749 = vpack.c.b16 %v1740, %v1739
  %v1750 = vpack.c.b16 %v1742, %v1741
  %v1751 = vpack.c.b16 %v1744, %v1743
  %v1752 = vpack.c.b16 %v1746, %v1745
  %v1753 = vpack.c.b16 %v1748, %v1747
  %v1760 = vsel %vm1670, %v1717, 0
  %1762 = vmatprep.subr.bf16.mxu0 0
  %1763 = vmatpush1.bf16.msra.mxu0 %v1749
  %1764 = vmatprep.subr.bf16.mxu0 0
  %1765 = vmatpush1.bf16.msra.mxu0 %v1750
  %1766 = vmatprep.subr.bf16.mxu0 0
  %1767 = vmatpush1.bf16.msra.mxu0 %v1751
  %1768 = vmatprep.subr.bf16.mxu0 0
  %1769 = vmatpush1.bf16.msra.mxu0 %v1752
  %1770 = vmatprep.subr.bf16.mxu0 0
  %1771 = vmatpush1.bf16.msra.mxu0 %v1753
  %1772 = vmatprep.subr.bf16.mxu0 0
  %1773 = vmatpush1.bf16.msra.mxu0 0
  %1774 = vmatprep.subr.bf16.mxu0 0
  %1775 = vmatpush1.bf16.msra.mxu0 0
  %1776 = vmatprep.subr.bf16.mxu0 0
  %1777 = vmatpush1.bf16.msra.mxu0 0
  %1778 = vmatprep.subr.bf16.mxu0 0
  %1779 = vmatpush1.bf16.msra.mxu0 0
  %1780 = vmatprep.subr.bf16.mxu0 0
  %1781 = vmatpush1.bf16.msra.mxu0 0
  %1782 = vmatprep.subr.bf16.mxu0 0
  %1783 = vmatpush1.bf16.msra.mxu0 0
  %1784 = vmatprep.subr.bf16.mxu0 0
  %1785 = vmatpush1.bf16.msra.mxu0 0
  %1786 = vmatprep.subr.bf16.mxu0 0
  %1787 = vmatpush1.bf16.msra.mxu0 0
  %1788 = vmatprep.subr.bf16.mxu0 0
  %1789 = vmatpush1.bf16.msra.mxu0 0
  %1790 = vmatprep.subr.bf16.mxu0 0
  %1791 = vmatpush1.bf16.msra.mxu0 0
  %1792 = vmatprep.subr.bf16.mxu0 0
  %1793 = vmatpush1.bf16.msra.mxu0 0
  %1794 = vmatprep.mubr.bf16.mxu0 0
  %1795 = vmatmul.mubr.bf16.gmra.mrb[0].mxu0 %v1760
  %v1796 = vpop.f32.mrb[0].mxu0
  %v1797 = vadd.f32 0.0, %v1796
  %v1798 = vpop.f32.mrb[0].mxu0
  %v1799 = vpop.f32.mrb[0].mxu0
  %v1800 = vpop.f32.mrb[0].mxu0
  %1801 = vdwg.mxu0
  %v1802 = vadd.f32 %v1714, %v1797
  %s1803 = scalar_lea.vmem [#allocation2], 16
  %v1804 = vld [vmem:[%s1803] sm:$0xff]
  %v1805 = vpack.c.bf16 %v1804, %v1804
  %s1806 = scalar_lea.vmem %s9, 80
  %v1807 = vld [vmem:[%s1806] sm:$0xf]
  %v1808 = vld [vmem:[%s1806 + $0x4] sm:$0xf]
  %v1809 = vld [vmem:[%s1806 + $0x8] sm:$0xf]
  %v1810 = vld [vmem:[%s1806 + $0xc] sm:$0xf]
  %v1811 = vld [vmem:[%s1806 + $0x10] sm:$0xf]
  %v1812 = vld [vmem:[%s1806 + $0x14] sm:$0xf]
  %v1813 = vld [vmem:[%s1806 + $0x18] sm:$0xf]
  %v1814 = vld [vmem:[%s1806 + $0x1c] sm:$0xf]
  %v1815 = vld [vmem:[%s1806 + $0x20] sm:$0xf]
  %v1816 = vld [vmem:[%s1806 + $0x24] sm:$0xf]
  %v1827 = vunpack.c.l.b16 %v1807
  %v1828 = vunpack.c.l.b16 %v1808
  %v1829 = vunpack.c.l.b16 %v1809
  %v1830 = vunpack.c.l.b16 %v1810
  %v1831 = vunpack.c.l.b16 %v1811
  %v1832 = vunpack.c.l.b16 %v1812
  %v1833 = vunpack.c.l.b16 %v1813
  %v1834 = vunpack.c.l.b16 %v1814
  %v1835 = vunpack.c.l.b16 %v1815
  %v1836 = vunpack.c.l.b16 %v1816
  %v1837 = vpack.c.b16 %v1828, %v1827
  %v1838 = vpack.c.b16 %v1830, %v1829
  %v1839 = vpack.c.b16 %v1832, %v1831
  %v1840 = vpack.c.b16 %v1834, %v1833
  %v1841 = vpack.c.b16 %v1836, %v1835
  %v1848 = vsel %vm1670, %v1805, 0
  %1850 = vmatprep.subr.bf16.mxu0 0
  %1851 = vmatpush1.bf16.msra.mxu0 %v1837
  %1852 = vmatprep.subr.bf16.mxu0 0
  %1853 = vmatpush1.bf16.msra.mxu0 %v1838
  %1854 = vmatprep.subr.bf16.mxu0 0
  %1855 = vmatpush1.bf16.msra.mxu0 %v1839
  %1856 = vmatprep.subr.bf16.mxu0 0
  %1857 = vmatpush1.bf16.msra.mxu0 %v1840
  %1858 = vmatprep.subr.bf16.mxu0 0
  %1859 = vmatpush1.bf16.msra.mxu0 %v1841
  %1860 = vmatprep.subr.bf16.mxu0 0
  %1861 = vmatpush1.bf16.msra.mxu0 0
  %1862 = vmatprep.subr.bf16.mxu0 0
  %1863 = vmatpush1.bf16.msra.mxu0 0
  %1864 = vmatprep.subr.bf16.mxu0 0
  %1865 = vmatpush1.bf16.msra.mxu0 0
  %1866 = vmatprep.subr.bf16.mxu0 0
  %1867 = vmatpush1.bf16.msra.mxu0 0
  %1868 = vmatprep.subr.bf16.mxu0 0
  %1869 = vmatpush1.bf16.msra.mxu0 0
  %1870 = vmatprep.subr.bf16.mxu0 0
  %1871 = vmatpush1.bf16.msra.mxu0 0
  %1872 = vmatprep.subr.bf16.mxu0 0
  %1873 = vmatpush1.bf16.msra.mxu0 0
  %1874 = vmatprep.subr.bf16.mxu0 0
  %1875 = vmatpush1.bf16.msra.mxu0 0
  %1876 = vmatprep.subr.bf16.mxu0 0
  %1877 = vmatpush1.bf16.msra.mxu0 0
  %1878 = vmatprep.subr.bf16.mxu0 0
  %1879 = vmatpush1.bf16.msra.mxu0 0
  %1880 = vmatprep.subr.bf16.mxu0 0
  %1881 = vmatpush1.bf16.msra.mxu0 0
  %1882 = vmatprep.mubr.bf16.mxu0 0
  %1883 = vmatmul.mubr.bf16.gmra.mrb[0].mxu0 %v1848
  %v1884 = vpop.f32.mrb[0].mxu0
  %v1885 = vadd.f32 0.0, %v1884
  %v1886 = vpop.f32.mrb[0].mxu0
  %v1887 = vpop.f32.mrb[0].mxu0
  %v1888 = vpop.f32.mrb[0].mxu0
  %1889 = vdwg.mxu0
  %v1890 = vadd.f32 %v1802, %v1885
  %s1891 = scalar_lea.vmem [#allocation2], 24
  %v1892 = vld [vmem:[%s1891] sm:$0xff]
  %v1893 = vpack.c.bf16 %v1892, %v1892
  %s1894 = scalar_lea.vmem %s9, 120
  %v1895 = vld [vmem:[%s1894] sm:$0xf]
  %v1896 = vld [vmem:[%s1894 + $0x4] sm:$0xf]
  %v1897 = vld [vmem:[%s1894 + $0x8] sm:$0xf]
  %v1898 = vld [vmem:[%s1894 + $0xc] sm:$0xf]
  %v1899 = vld [vmem:[%s1894 + $0x10] sm:$0xf]
  %v1900 = vld [vmem:[%s1894 + $0x14] sm:$0xf]
  %v1901 = vld [vmem:[%s1894 + $0x18] sm:$0xf]
  %v1902 = vld [vmem:[%s1894 + $0x1c] sm:$0xf]
  %v1903 = vld [vmem:[%s1894 + $0x20] sm:$0xf]
  %v1904 = vld [vmem:[%s1894 + $0x24] sm:$0xf]
  %v1915 = vunpack.c.l.b16 %v1895
  %v1916 = vunpack.c.l.b16 %v1896
  %v1917 = vunpack.c.l.b16 %v1897
  %v1918 = vunpack.c.l.b16 %v1898
  %v1919 = vunpack.c.l.b16 %v1899
  %v1920 = vunpack.c.l.b16 %v1900
  %v1921 = vunpack.c.l.b16 %v1901
  %v1922 = vunpack.c.l.b16 %v1902
  %v1923 = vunpack.c.l.b16 %v1903
  %v1924 = vunpack.c.l.b16 %v1904
  %v1925 = vpack.c.b16 %v1916, %v1915
  %v1926 = vpack.c.b16 %v1918, %v1917
  %v1927 = vpack.c.b16 %v1920, %v1919
  %v1928 = vpack.c.b16 %v1922, %v1921
  %v1929 = vpack.c.b16 %v1924, %v1923
  %v1936 = vsel %vm1670, %v1893, 0
  %1938 = vmatprep.subr.bf16.mxu0 0
  %1939 = vmatpush1.bf16.msra.mxu0 %v1925
  %1940 = vmatprep.subr.bf16.mxu0 0
  %1941 = vmatpush1.bf16.msra.mxu0 %v1926
  %1942 = vmatprep.subr.bf16.mxu0 0
  %1943 = vmatpush1.bf16.msra.mxu0 %v1927
  %1944 = vmatprep.subr.bf16.mxu0 0
  %1945 = vmatpush1.bf16.msra.mxu0 %v1928
  %1946 = vmatprep.subr.bf16.mxu0 0
  %1947 = vmatpush1.bf16.msra.mxu0 %v1929
  %1948 = vmatprep.subr.bf16.mxu0 0
  %1949 = vmatpush1.bf16.msra.mxu0 0
  %1950 = vmatprep.subr.bf16.mxu0 0
  %1951 = vmatpush1.bf16.msra.mxu0 0
  %1952 = vmatprep.subr.bf16.mxu0 0
  %1953 = vmatpush1.bf16.msra.mxu0 0
  %1954 = vmatprep.subr.bf16.mxu0 0
  %1955 = vmatpush1.bf16.msra.mxu0 0
  %1956 = vmatprep.subr.bf16.mxu0 0
  %1957 = vmatpush1.bf16.msra.mxu0 0
  %1958 = vmatprep.subr.bf16.mxu0 0
  %1959 = vmatpush1.bf16.msra.mxu0 0
  %1960 = vmatprep.subr.bf16.mxu0 0
  %1961 = vmatpush1.bf16.msra.mxu0 0
  %1962 = vmatprep.subr.bf16.mxu0 0
  %1963 = vmatpush1.bf16.msra.mxu0 0
  %1964 = vmatprep.subr.bf16.mxu0 0
  %1965 = vmatpush1.bf16.msra.mxu0 0
  %1966 = vmatprep.subr.bf16.mxu0 0
  %1967 = vmatpush1.bf16.msra.mxu0 0
  %1968 = vmatprep.subr.bf16.mxu0 0
  %1969 = vmatpush1.bf16.msra.mxu0 0
  %1970 = vmatprep.mubr.bf16.mxu0 0
  %1971 = vmatmul.mubr.bf16.gmra.mrb[0].mxu0 %v1936
  %v1972 = vpop.f32.mrb[0].mxu0
  %v1973 = vadd.f32 0.0, %v1972
  %v1974 = vpop.f32.mrb[0].mxu0
  %v1975 = vpop.f32.mrb[0].mxu0
  %v1976 = vpop.f32.mrb[0].mxu0
  %1977 = vdwg.mxu0
  %v1978 = vadd.f32 %v1890, %v1973
  %s1979 = scalar_lea.vmem [#allocation2], 32
  %v1980 = vld [vmem:[%s1979] sm:$0xff]
  %v1981 = vpack.c.bf16 %v1980, %v1980
  %s1982 = scalar_lea.vmem %s9, 160
  %v1983 = vld [vmem:[%s1982] sm:$0xf]
  %v1984 = vld [vmem:[%s1982 + $0x4] sm:$0xf]
  %v1985 = vld [vmem:[%s1982 + $0x8] sm:$0xf]
  %v1986 = vld [vmem:[%s1982 + $0xc] sm:$0xf]
  %v1987 = vld [vmem:[%s1982 + $0x10] sm:$0xf]
  %v1988 = vld [vmem:[%s1982 + $0x14] sm:$0xf]
  %v1989 = vld [vmem:[%s1982 + $0x18] sm:$0xf]
  %v1990 = vld [vmem:[%s1982 + $0x1c] sm:$0xf]
  %v1991 = vld [vmem:[%s1982 + $0x20] sm:$0xf]
  %v1992 = vld [vmem:[%s1982 + $0x24] sm:$0xf]
  %v2003 = vunpack.c.l.b16 %v1983
  %v2004 = vunpack.c.l.b16 %v1984
  %v2005 = vunpack.c.l.b16 %v1985
  %v2006 = vunpack.c.l.b16 %v1986
  %v2007 = vunpack.c.l.b16 %v1987
  %v2008 = vunpack.c.l.b16 %v1988
  %v2009 = vunpack.c.l.b16 %v1989
  %v2010 = vunpack.c.l.b16 %v1990
  %v2011 = vunpack.c.l.b16 %v1991
  %v2012 = vunpack.c.l.b16 %v1992
  %v2013 = vpack.c.b16 %v2004, %v2003
  %v2014 = vpack.c.b16 %v2006, %v2005
  %v2015 = vpack.c.b16 %v2008, %v2007
  %v2016 = vpack.c.b16 %v2010, %v2009
  %v2017 = vpack.c.b16 %v2012, %v2011
  %v2024 = vsel %vm1670, %v1981, 0
  %2026 = vmatprep.subr.bf16.mxu0 0
  %2027 = vmatpush1.bf16.msra.mxu0 %v2013
  %2028 = vmatprep.subr.bf16.mxu0 0
  %2029 = vmatpush1.bf16.msra.mxu0 %v2014
  %2030 = vmatprep.subr.bf16.mxu0 0
  %2031 = vmatpush1.bf16.msra.mxu0 %v2015
  %2032 = vmatprep.subr.bf16.mxu0 0
  %2033 = vmatpush1.bf16.msra.mxu0 %v2016
  %2034 = vmatprep.subr.bf16.mxu0 0
  %2035 = vmatpush1.bf16.msra.mxu0 %v2017
  %2036 = vmatprep.subr.bf16.mxu0 0
  %2037 = vmatpush1.bf16.msra.mxu0 0
  %2038 = vmatprep.subr.bf16.mxu0 0
  %2039 = vmatpush1.bf16.msra.mxu0 0
  %2040 = vmatprep.subr.bf16.mxu0 0
  %2041 = vmatpush1.bf16.msra.mxu0 0
  %2042 = vmatprep.subr.bf16.mxu0 0
  %2043 = vmatpush1.bf16.msra.mxu0 0
  %2044 = vmatprep.subr.bf16.mxu0 0
  %2045 = vmatpush1.bf16.msra.mxu0 0
  %2046 = vmatprep.subr.bf16.mxu0 0
  %2047 = vmatpush1.bf16.msra.mxu0 0
  %2048 = vmatprep.subr.bf16.mxu0 0
  %2049 = vmatpush1.bf16.msra.mxu0 0
  %2050 = vmatprep.subr.bf16.mxu0 0
  %2051 = vmatpush1.bf16.msra.mxu0 0
  %2052 = vmatprep.subr.bf16.mxu0 0
  %2053 = vmatpush1.bf16.msra.mxu0 0
  %2054 = vmatprep.subr.bf16.mxu0 0
  %2055 = vmatpush1.bf16.msra.mxu0 0
  %2056 = vmatprep.subr.bf16.mxu0 0
  %2057 = vmatpush1.bf16.msra.mxu0 0
  %2058 = vmatprep.mubr.bf16.mxu0 0
  %2059 = vmatmul.mubr.bf16.gmra.mrb[0].mxu0 %v2024
  %v2060 = vpop.f32.mrb[0].mxu0
  %v2061 = vadd.f32 0.0, %v2060
  %v2062 = vpop.f32.mrb[0].mxu0
  %v2063 = vpop.f32.mrb[0].mxu0
  %v2064 = vpop.f32.mrb[0].mxu0
  %2065 = vdwg.mxu0
  %v2066 = vadd.f32 %v1978, %v2061
  %v2067 = vtanh.pop %v2066
  %v2068 = vpack.c.bf16 %v2067, %v2067
  %v2069 = vld [vmem:[%s11] sm:$0xf]
  %v2070 = vld [vmem:[%s11 + $0x4] sm:$0xf]
  %v2071 = vld [vmem:[%s11 + $0x8] sm:$0xf]
  %v2072 = vld [vmem:[%s11 + $0xc] sm:$0xf]
  %v2073 = vld [vmem:[%s11 + $0x10] sm:$0xf]
  %v2074 = vld [vmem:[%s11 + $0x14] sm:$0xf]
  %v2075 = vld [vmem:[%s11 + $0x18] sm:$0xf]
  %v2076 = vld [vmem:[%s11 + $0x1c] sm:$0xf]
  %v2077 = vld [vmem:[%s11 + $0x20] sm:$0xf]
  %v2078 = vld [vmem:[%s11 + $0x24] sm:$0xf]
  %v2079 = vld [vmem:[%s11 + $0x28] sm:$0xf]
  %v2080 = vld [vmem:[%s11 + $0x2c] sm:$0xf]
  %v2081 = vld [vmem:[%s11 + $0x30] sm:$0xf]
  %v2082 = vld [vmem:[%s11 + $0x34] sm:$0xf]
  %v2083 = vld [vmem:[%s11 + $0x38] sm:$0xf]
  %v2084 = vld [vmem:[%s12] sm:$0x1]
  %v2086 = vlaneseq
  %v2087 = vshrl.u32 %v2086, 7
  %v2088 = vsub.s32 0, %v2087
  %v2089 = vrot.slane %v2084, %v2088
  %v2106 = vunpack.c.l.b16 %v2069
  %v2107 = vunpack.c.l.b16 %v2070
  %v2108 = vunpack.c.l.b16 %v2071
  %v2109 = vunpack.c.l.b16 %v2072
  %v2110 = vunpack.c.l.b16 %v2073
  %v2111 = vunpack.c.l.b16 %v2074
  %v2112 = vunpack.c.l.b16 %v2075
  %v2113 = vunpack.c.l.b16 %v2076
  %v2114 = vunpack.c.l.b16 %v2077
  %v2115 = vunpack.c.l.b16 %v2078
  %v2116 = vunpack.c.l.b16 %v2079
  %v2117 = vunpack.c.l.b16 %v2080
  %v2118 = vunpack.c.l.b16 %v2081
  %v2119 = vunpack.c.l.b16 %v2082
  %v2120 = vunpack.c.l.b16 %v2083
  %v2121 = vpack.c.b16 %v2107, %v2106
  %v2122 = vpack.c.b16 %v2109, %v2108
  %v2123 = vpack.c.b16 %v2111, %v2110
  %v2124 = vpack.c.b16 %v2113, %v2112
  %v2125 = vpack.c.b16 %v2115, %v2114
  %v2126 = vpack.c.b16 %v2117, %v2116
  %v2127 = vpack.c.b16 %v2119, %v2118
  %v2128 = vpack.c.b16 %v2120, %v2120
  %vm2136 = vcmask 982016
  %v2138 = vsel %vm2136, %v2068, 0
  %vm2140 = vcmask 1043456
  %v2142 = vsel %vm2140, %v2128, 0
  %2144 = vmatprep.subr.bf16.mxu0 0
  %2145 = vmatpush1.bf16.msra.mxu0 %v2121
  %2146 = vmatprep.subr.bf16.mxu0 0
  %2147 = vmatpush1.bf16.msra.mxu0 %v2122
  %2148 = vmatprep.subr.bf16.mxu0 0
  %2149 = vmatpush1.bf16.msra.mxu0 %v2123
  %2150 = vmatprep.subr.bf16.mxu0 0
  %2151 = vmatpush1.bf16.msra.mxu0 %v2124
  %2152 = vmatprep.subr.bf16.mxu0 0
  %2153 = vmatpush1.bf16.msra.mxu0 %v2125
  %2154 = vmatprep.subr.bf16.mxu0 0
  %2155 = vmatpush1.bf16.msra.mxu0 %v2126
  %2156 = vmatprep.subr.bf16.mxu0 0
  %2157 = vmatpush1.bf16.msra.mxu0 %v2127
  %2158 = vmatprep.subr.bf16.mxu0 0
  %2159 = vmatpush1.bf16.msra.mxu0 %v2142
  %2160 = vmatprep.subr.bf16.mxu0 0
  %2161 = vmatpush1.bf16.msra.mxu0 0
  %2162 = vmatprep.subr.bf16.mxu0 0
  %2163 = vmatpush1.bf16.msra.mxu0 0
  %2164 = vmatprep.subr.bf16.mxu0 0
  %2165 = vmatpush1.bf16.msra.mxu0 0
  %2166 = vmatprep.subr.bf16.mxu0 0
  %2167 = vmatpush1.bf16.msra.mxu0 0
  %2168 = vmatprep.subr.bf16.mxu0 0
  %2169 = vmatpush1.bf16.msra.mxu0 0
  %2170 = vmatprep.subr.bf16.mxu0 0
  %2171 = vmatpush1.bf16.msra.mxu0 0
  %2172 = vmatprep.subr.bf16.mxu0 0
  %2173 = vmatpush1.bf16.msra.mxu0 0
  %2174 = vmatprep.subr.bf16.mxu0 0
  %2175 = vmatpush1.bf16.msra.mxu0 0
  %2176 = vmatprep.mubr.bf16.mxu0 0
  %2177 = vmatmul.mubr.bf16.gmra.mrb[0].mxu0 %v2138
  %v2178 = vpop.f32.mrb[0].mxu0
  %v2179 = vadd.f32 %v2089, %v2178
  %v2180 = vpop.f32.mrb[0].mxu0
  %v2181 = vpop.f32.mrb[0].mxu0
  %v2182 = vpop.f32.mrb[0].mxu0
  %2183 = vdwg.mxu0
  %v2184 = vtanh.pop %v2179
  %v2185 = vpack.c.bf16 %v2184, %v2184
  %v2186 = vld [vmem:[%s13] sm:$0xf]
  %v2187 = vld [vmem:[%s13 + $0x4] sm:$0xf]
  %v2188 = vld [vmem:[%s13 + $0x8] sm:$0xf]
  %v2189 = vld [vmem:[%s13 + $0xc] sm:$0xf]
  %v2190 = vld [vmem:[%s13 + $0x10] sm:$0xf]
  %v2191 = vld [vmem:[%s13 + $0x14] sm:$0xf]
  %v2192 = vld [vmem:[%s13 + $0x18] sm:$0xf]
  %v2193 = vld [vmem:[%s13 + $0x1c] sm:$0xf]
  %v2194 = vld [vmem:[%s13 + $0x20] sm:$0xf]
  %v2195 = vld [vmem:[%s13 + $0x24] sm:$0xf]
  %v2196 = vld [vmem:[%s13 + $0x28] sm:$0x3]
  %v2197 = vld [vmem:[%s14] sm:$0x1]
  %v2199 = vlaneseq
  %v2200 = vshrl.u32 %v2199, 7
  %v2201 = vsub.s32 0, %v2200
  %v2202 = vrot.slane %v2197, %v2201
  %v2215 = vunpack.c.l.b16 %v2186
  %v2216 = vunpack.c.l.b16 %v2187
  %v2217 = vunpack.c.l.b16 %v2188
  %v2218 = vunpack.c.l.b16 %v2189
  %v2219 = vunpack.c.l.b16 %v2190
  %v2220 = vunpack.c.l.b16 %v2191
  %v2221 = vunpack.c.l.b16 %v2192
  %v2222 = vunpack.c.l.b16 %v2193
  %v2223 = vunpack.c.l.b16 %v2194
  %v2224 = vunpack.c.l.b16 %v2195
  %v2225 = vunpack.c.l.b16 %v2196
  %v2226 = vpack.c.b16 %v2216, %v2215
  %v2227 = vpack.c.b16 %v2218, %v2217
  %v2228 = vpack.c.b16 %v2220, %v2219
  %v2229 = vpack.c.b16 %v2222, %v2221
  %v2230 = vpack.c.b16 %v2224, %v2223
  %v2231 = vpack.c.b16 %v2225, %v2225
  %vm2237 = vcmask 687104
  %v2239 = vsel %vm2237, %v2185, 0
  %vm2241 = vcmask 1041408
  %v2243 = vsel %vm2241, %v2231, 0
  %2245 = vmatprep.subr.bf16.mxu0 0
  %2246 = vmatpush1.bf16.msra.mxu0 %v2226
  %2247 = vmatprep.subr.bf16.mxu0 0
  %2248 = vmatpush1.bf16.msra.mxu0 %v2227
  %2249 = vmatprep.subr.bf16.mxu0 0
  %2250 = vmatpush1.bf16.msra.mxu0 %v2228
  %2251 = vmatprep.subr.bf16.mxu0 0
  %2252 = vmatpush1.bf16.msra.mxu0 %v2229
  %2253 = vmatprep.subr.bf16.mxu0 0
  %2254 = vmatpush1.bf16.msra.mxu0 %v2230
  %2255 = vmatprep.subr.bf16.mxu0 0
  %2256 = vmatpush1.bf16.msra.mxu0 %v2243
  %2257 = vmatprep.subr.bf16.mxu0 0
  %2258 = vmatpush1.bf16.msra.mxu0 0
  %2259 = vmatprep.subr.bf16.mxu0 0
  %2260 = vmatpush1.bf16.msra.mxu0 0
  %2261 = vmatprep.subr.bf16.mxu0 0
  %2262 = vmatpush1.bf16.msra.mxu0 0
  %2263 = vmatprep.subr.bf16.mxu0 0
  %2264 = vmatpush1.bf16.msra.mxu0 0
  %2265 = vmatprep.subr.bf16.mxu0 0
  %2266 = vmatpush1.bf16.msra.mxu0 0
  %2267 = vmatprep.subr.bf16.mxu0 0
  %2268 = vmatpush1.bf16.msra.mxu0 0
  %2269 = vmatprep.subr.bf16.mxu0 0
  %2270 = vmatpush1.bf16.msra.mxu0 0
  %2271 = vmatprep.subr.bf16.mxu0 0
  %2272 = vmatpush1.bf16.msra.mxu0 0
  %2273 = vmatprep.subr.bf16.mxu0 0
  %2274 = vmatpush1.bf16.msra.mxu0 0
  %2275 = vmatprep.subr.bf16.mxu0 0
  %2276 = vmatpush1.bf16.msra.mxu0 0
  %2277 = vmatprep.mubr.bf16.mxu0 0
  %2278 = vmatmul.mubr.bf16.gmra.mrb[0].mxu0 %v2239
  %v2279 = vpop.f32.mrb[0].mxu0
  %v2280 = vadd.f32 %v2202, %v2279
  %v2281 = vpop.f32.mrb[0].mxu0
  %v2282 = vpop.f32.mrb[0].mxu0
  %v2283 = vpop.f32.mrb[0].mxu0
  %2284 = vdwg.mxu0
  %2285 = vst [vmem:[%s15] sm:$0xff] %v2280
  // Predicated region
  $region69: #{lenet5_forward.1} parent=0 // pred_check
    _
  $region70: #{lenet5_forward.1} parent=0 // pred_check_branch
    %2287 = sbr.rel (0) target = $region72
  $region71: #{lenet5_forward.1} parent=0 // pred_region
    _
  $region72: #{lenet5_forward.1} parent=0 // pred_fallthru
    _
  // Predicated region
  $region73: #{lenet5_forward.1} parent=0 // pred_check
    _
  $region74: #{lenet5_forward.1} parent=0 // pred_check_branch
    %2289 = sbr.rel (0) target = $region76
  $region75: #{lenet5_forward.1} parent=0 // pred_region
    _
  $region76: #{lenet5_forward.1} parent=0 // pred_fallthru
    _

</llo_original>
